<compile_context>
chip_gen: v5e
topology: v5e:2x2
jax: 0.10.0
libtpu: 0.0.40
codegen_flags: <defaults>
</compile_context>

<pallas_src>
import numpy as np
import jax
import jax.numpy as jnp
from jax.experimental import pallas as pl
from jax.experimental.pallas import tpu as pltpu

EPS = 1e-5  # LayerNorm variance_epsilon

# rows of the packed (10, D) parameter table
_V_REL_WX, _V_REL_WY, _V_REL_B, _V_REL_LN_W, _V_REL_LN_B = 0, 1, 2, 3, 4
_V_GATE_LN_W, _V_GATE_LN_B = 5, 6
_V_OUT_B, _V_OUT_LN_W, _V_OUT_LN_B = 7, 8, 9
_NUM_VEC = 10

# slots of the stacked (3, D, D) bf16 weight tensor
_W_GATE_HI, _W_GATE_R, _W_OUT = 0, 1, 2


def _layer_norm(x, w, b):
    # the module's custom LayerNorm: biased variance, eps inside the sqrt (rsqrt -> EUP slot).
    u = jnp.mean(x, axis=-1, keepdims=True)
    xc = x - u
    s = jnp.mean(xc * xc, axis=-1, keepdims=True)
    return w * (xc * jax.lax.rsqrt(s + EPS)) + b


def global_interaction_kernel(
    scal_ref,    # SMEM (2,)        [war_ln_w, war_ln_b]
    corr_ref,    # VMEM (TI*N, 2)   relative coords, pair k = i_local*N + j   (f32)
    nei_ref,     # VMEM (TI, 1, N)  neighbour-exists flags, j on lanes        (f32)
    hs_all_ref,  # VMEM (N, D)      hidden_state of every agent               (f32)
    hj_ref,      # VMEM (N, D)      precomputed  hidden_state @ W_gate_hj + b (f32, hoisted)
    cn_ref,      # VMEM (TI, D)     cell state of this tile's query agents    (f32)
    wstack_ref,  # VMEM (3, D, D)   [W_gate_hi, W_gate_r, W_out]              (bf16)
    vec_ref,     # VMEM (10, D)     packed biases / LayerNorm params          (f32)
    out_ref,     # VMEM (TI, 2*D)   [:, :D] = h_new, [:, D:] = c_new
):
    TI, _, N = nei_ref.shape
    D = hs_all_ref.shape[1]
    bf16 = jnp.bfloat16

    vec = vec_ref[...]                                          # (10, D) f32
    hs_all = hs_all_ref[...]                                    # (N, D)  f32
    # query rows h_i of this tile: sliced from the full block (no duplicated operand)
    i0 = pl.multiple_of(pl.program_id(0) * TI, TI)
    hs_q = hs_all_ref[pl.ds(i0, TI), :]                         # (TI, D)

    # ---- relativeLayer: Linear(2->D) + LayerNorm + ReLU on every (i, j) pair.
    #      K=2 "matmul" as two lane-broadcast FMAs (VPU), kept in f32.
    corr = corr_ref[...]                                        # (TI*N, 2)
    r_lin = (corr[:, 0:1] * vec[_V_REL_WX:_V_REL_WX + 1, :]
             + corr[:, 1:2] * vec[_V_REL_WY:_V_REL_WY + 1, :]
             + vec[_V_REL_B:_V_REL_B + 1, :])                   # (TI*N, D)
    r_mlp = jnp.maximum(
        _layer_norm(r_lin, vec[_V_REL_LN_W:_V_REL_LN_W + 1, :],
                    vec[_V_REL_LN_B:_V_REL_LN_B + 1, :]), 0.0)

    # ---- ngate: Linear(3D->D) as split partial matmuls (bf16 MXU operands, f32 acc).
    #      The h_j projection (+bias) was hoisted to the wrapper (grid-invariant) -> hj_ref.
    r_g = jnp.dot(r_mlp.astype(bf16), wstack_ref[_W_GATE_R],
                  preferred_element_type=jnp.float32)           # (TI*N, D)
    hi_g = jnp.dot(hs_q.astype(bf16), wstack_ref[_W_GATE_HI],
                   preferred_element_type=jnp.float32)          # (TI, D)
    gate_lin = (r_g.reshape(TI, N, D)
                + hi_g[:, None, :]
                + hj_ref[...][None, :, :])                      # (TI, N, D)
    gate = jax.nn.sigmoid(
        _layer_norm(gate_lin, vec[_V_GATE_LN_W:_V_GATE_LN_W + 1, :],
                    vec[_V_GATE_LN_B:_V_GATE_LN_B + 1, :]))

    # ---- WAr branch constant: LayerNorm over 1 feature is exactly 0, so the branch output is
    #      tt = relu(war_ln_b), independent of the inputs (the Linear(3D->1) is dead compute).
    tt = jnp.maximum(scal_ref[1], 0.0)

    # ---- attention closed form.  torch: Pos[m] = tt, Pos[Pos==0] = -10000, softmax over j.
    #      tt is a per-call constant, exp(-10000) underflows to 0 in f32, so the softmax
    #      weight at a neighbour is 1/count(i) (or 1/N when tt == 0); 0 elsewhere.
    nei = nei_ref[...]                                          # (TI, 1, N)
    mask = nei > 0.0
    maskf = jnp.where(mask, 1.0, 0.0)                           # exact 0/1, bf16-safe
    count = jnp.sum(maskf, axis=-1, keepdims=True)              # (TI, 1, 1)
    denom = jnp.where(tt != 0.0, jnp.maximum(count, 1.0), float(N))
    inv = 1.0 / denom                                           # (TI, 1, 1) f32

    # ---- message aggregation: sum_j mask[i,j] * gate[i,j,:] * h[j,:], scaled by inv in f32.
    msg = (gate * hs_all[None, :, :]).astype(bf16)              # (TI, N, D) bf16
    h_sum = jax.lax.dot_general(
        maskf.astype(bf16), msg,
        dimension_numbers=(((2,), (1,)), ((0,), (0,))),
        preferred_element_type=jnp.float32).reshape(TI, D)      # (TI, D)
    h_sum = h_sum * inv.reshape(TI, 1)

    # ---- self.weight MLP(D->D) and state refinement
    out_lin = (jnp.dot(h_sum.astype(bf16), wstack_ref[_W_OUT],
                       preferred_element_type=jnp.float32)
               + vec[_V_OUT_B:_V_OUT_B + 1, :])
    refined = jnp.maximum(
        _layer_norm(out_lin, vec[_V_OUT_LN_W:_V_OUT_LN_W + 1, :],
                    vec[_V_OUT_LN_B:_V_OUT_LN_B + 1, :]), 0.0)
    c_new = refined + cn_ref[...]
    out_ref[:, :D] = hs_q + jnp.tanh(c_new)
    out_ref[:, D:] = c_new


def _plan(N, D):
    """Pick the query-row tile TI and the scoped-VMEM limit from the chip's VMEM capacity."""
    try:
        cap = int(pltpu.get_tpu_info().vmem_capacity_bytes)
    except Exception:
        cap = 64 << 20                      # conservative fallback = v7x physical VMEM
    budget = cap // 2                       # keep working set under half of physical VMEM

    def pad(r, c):                          # (8,128)-padded f32 VMEM footprint of an (r, c) tile
        return (-(-r // 8) * 8) * (-(-c // 128) * 128) * 4

    def need_bytes(t):
        work = 8 * t * pad(N, D)            # live (t, N, D)-shaped f32 intermediates
        blocks = 2 * (pad(t * N, 2)         # corr (double-buffered)
                      + t * pad(8, N)       # nei
                      + 2 * pad(N, D)       # hs_all + hj
                      + pad(t, D)           # cn
                      + 3 * pad(D, D)       # weight stack (counted at f32 width: conservative)
                      + pad(16, D)          # vec table
                      + pad(t, 2 * D))      # packed output
        return work + blocks

    cands = [t for t in range(8, N + 1, 8) if N % t == 0] or [N]
    fit = [t for t in cands if need_bytes(t) <= budget] or [cands[0]]
    multi = [t for t in fit if N // t >= 2]  # prefer grid >= 2 so v7x megacore can split work
    ti = max(multi) if multi else max(fit)
    limit = int(min(max(need_bytes(ti) + (8 << 20), 32 << 20), (cap * 3) // 4))
    return ti, limit


def global_interaction(corr_index, nei_index, hidden_state, cn, params):
    """corr_index (N, N, 2), nei_index (N, N), hidden_state / cn (N, D)."""
    N = corr_index.shape[0]
    D = hidden_state.shape[1]
    f32 = jnp.float32
    TI, vmem_limit = _plan(N, D)

    corr_flat = corr_index.reshape(N * N, 2).astype(f32)        # pair k = i*N + j
    nei_lane = nei_index.reshape(N, 1, N).astype(f32)           # neighbour index j on lanes
    hs = hidden_state.astype(f32)
    cn_f = cn.astype(f32)

    p = params
    wg = p["ngate_w"].astype(f32)                               # (3D, D) = [W_r; W_hi; W_hj]
    w_stack = jnp.stack(
        [wg[D:2 * D], wg[:D], p["out_w"].astype(f32)], axis=0).astype(jnp.bfloat16)  # (3,D,D)
    vec = jnp.concatenate(
        [p["rel_w"].astype(f32).reshape(2, D),
         p["rel_b"].reshape(1, D), p["rel_ln_w"].reshape(1, D), p["rel_ln_b"].reshape(1, D),
         p["ngate_ln_w"].reshape(1, D), p["ngate_ln_b"].reshape(1, D),
         p["out_b"].reshape(1, D), p["out_ln_w"].reshape(1, D), p["out_ln_b"].reshape(1, D)],
        axis=0).astype(f32)                                     # (10, D)
    scal = jnp.stack(
        [p["war_ln_w"].reshape(()), p["war_ln_b"].reshape(())]).astype(f32)  # (2,) -> SMEM

    def _run():
        # grid-invariant neighbour projection (with ngate bias folded in), computed once
        # in plain XLA instead of once per grid step inside the kernel.
        hj_gb = hs @ wg[2 * D:3 * D] + p["ngate_b"].astype(f32).reshape(1, D)   # (N, D)

        grid_spec = pltpu.PrefetchScalarGridSpec(
            num_scalar_prefetch=0,
            grid=(N // TI,),
            in_specs=[
                pl.BlockSpec(memory_space=pltpu.MemorySpace.SMEM),   # scalars
                pl.BlockSpec((TI * N, 2), lambda i: (i, 0)),         # corr (rows of this tile)
                pl.BlockSpec((TI, 1, N), lambda i: (i, 0, 0)),       # nei  (lane-dense)
                pl.BlockSpec((N, D), lambda i: (0, 0)),              # hidden_state (all agents)
                pl.BlockSpec((N, D), lambda i: (0, 0)),              # hoisted h_j projection
                pl.BlockSpec((TI, D), lambda i: (i, 0)),             # cn (query rows)
                pl.BlockSpec((3, D, D), lambda i: (0, 0, 0)),        # stacked bf16 weights
                pl.BlockSpec((_NUM_VEC, D), lambda i: (0, 0)),       # packed bias / LN vectors
            ],
            out_specs=pl.BlockSpec((TI, 2 * D), lambda i: (i, 0)),   # packed [h | c] slab
        )
        out = pl.pallas_call(
            global_interaction_kernel,
            out_shape=jax.ShapeDtypeStruct((N, 2 * D), f32),
            grid_spec=grid_spec,
            compiler_params=pltpu.CompilerParams(
                dimension_semantics=("parallel",),
                vmem_limit_bytes=vmem_limit,
            ),
        )(scal, corr_flat, nei_lane, hs, hj_gb, cn_f, w_stack, vec)
        return out[:, :D], out[:, D:]

    def _skip():
        return hs, cn_f

    # torch early return "if no neighbour: return (hidden_state, cn)" -> skip the kernel.
    has_nei = jnp.any(nei_index > 0)
    return jax.lax.cond(has_nei, _run, _skip)


def init_params(key, D):
    # deterministic synthetic init (shapes follow the module's __init__).
    ks = jax.random.split(key, 8)

    def u(k, shape, bound):
        return jax.random.uniform(k, shape, jnp.float32, -bound, bound)

    b2, b3d, bd = 1.0 / np.sqrt(2.0), 1.0 / np.sqrt(3.0 * D), 1.0 / np.sqrt(D)
    return dict(
        rel_w=u(ks[0], (2, D), b2), rel_b=u(ks[1], (1, D), b2),
        rel_ln_w=jnp.ones((1, D), jnp.float32), rel_ln_b=jnp.zeros((1, D), jnp.float32),
        ngate_w=u(ks[2], (3 * D, D), b3d), ngate_b=u(ks[3], (1, D), b3d),
        ngate_ln_w=jnp.ones((1, D), jnp.float32), ngate_ln_b=jnp.zeros((1, D), jnp.float32),
        war_w=u(ks[4], (3 * D, 1), b3d), war_b=u(ks[5], (1,), b3d),
        war_ln_w=jnp.ones((1,), jnp.float32),
        # nonzero bias so the neighbour-count softmax path is actually exercised
        war_ln_b=jnp.full((1,), 0.25, jnp.float32),
        out_w=u(ks[6], (D, D), bd), out_b=u(ks[7], (1, D), bd),
        out_ln_w=jnp.ones((1, D), jnp.float32), out_ln_b=jnp.zeros((1, D), jnp.float32),
    )


def reference_numpy(corr, nei, hs, cn, p):
    """Pure numpy transcription of the PyTorch forward (gather/scatter form)."""
    corr = np.asarray(corr, np.float32); nei = np.asarray(nei, np.float32)
    hs = np.asarray(hs, np.float32); cn = np.asarray(cn, np.float32)
    N, D = hs.shape
    g = {k: np.asarray(v, np.float32) for k, v in p.items()}

    def ln(x, w, b):
        u = x.mean(-1, keepdims=True)
        s = ((x - u) ** 2).mean(-1, keepdims=True)
        return w * ((x - u) / np.sqrt(s + EPS)) + b

    def mlp(x, W, b, gw, gb):
        return np.maximum(ln(x @ W + b, gw, gb), 0.0)

    def mlp_gate(x, W, b, gw, gb):
        return 1.0 / (1.0 + np.exp(-ln(x @ W + b, gw, gb)))

    nei_t = nei.reshape(N * N)
    corr_t = corr.reshape(N * N, 2)
    m = nei_t > 0
    if m.sum() == 0:
        return hs, cn
    nei_inputs = np.tile(hs, (N, 1))                                      # h_j
    hi_t = nei_inputs.reshape(N, N, D).transpose(1, 0, 2).reshape(-1, D)  # h_i
    r_t = mlp(corr_t[m], g["rel_w"], g["rel_b"], g["rel_ln_w"], g["rel_ln_b"])
    tmp = np.concatenate([r_t, hi_t[m], nei_inputs[m]], axis=1)
    nGate = mlp_gate(tmp, g["ngate_w"], g["ngate_b"], g["ngate_ln_w"], g["ngate_ln_b"])
    tt = mlp(tmp, g["war_w"], g["war_b"], g["war_ln_w"], g["war_ln_b"]).reshape(-1)
    Pos_t = np.zeros(N * N, np.float32); Pos_t[m] = tt
    Pos = Pos_t.reshape(N, N).copy()
    Pos[Pos == 0] = -10000.0
    Pos = Pos - Pos.max(axis=1, keepdims=True)
    Pos = np.exp(Pos); Pos = Pos / Pos.sum(axis=1, keepdims=True)
    Pos_t = Pos.reshape(-1)
    H = np.zeros((N * N, D), np.float32)
    H[m] = nei_inputs[m] * nGate
    H[m] = H[m] * Pos_t[m][:, None]
    H = H.reshape(N, N, D)
    Hsum = mlp(H.sum(1), g["out_w"], g["out_b"], g["out_ln_w"], g["out_ln_b"])
    C = Hsum + cn
    return hs + np.tanh(C), C


if __name__ == "__main__":
    key = jax.random.PRNGKey(0)
    N, D = 8, 32
    k1, k2, k3, k4, k5 = jax.random.split(key, 5)
    corr_index = jax.random.normal(k1, (N, N, 2), jnp.float32)
    nei_index = (jax.random.uniform(k2, (N, N)) > 0.4).astype(jnp.float32)
    hidden_state = 0.5 * jax.random.normal(k3, (N, D), jnp.float32)
    cn = 0.5 * jax.random.normal(k4, (N, D), jnp.float32)
    params = init_params(k5, D)

    run = jax.jit(global_interaction)

    # main path (tt > 0 -> per-row 1/neighbour_count weights); bf16 MXU operands -> 2e-2 tol
    h_new, c_new = run(corr_index, nei_index, hidden_state, cn, params)
    jax.block_until_ready((h_new, c_new))
    h_ref, c_ref = reference_numpy(corr_index, nei_index, hidden_state, cn, params)
    np.testing.assert_allclose(np.asarray(h_new), h_ref, rtol=2e-2, atol=2e-2)
    np.testing.assert_allclose(np.asarray(c_new), c_ref, rtol=2e-2, atol=2e-2)

    # tt == 0 branch of the closed-form softmax (war_ln_b = 0 -> uniform 1/N weights)
    params0 = dict(params, war_ln_b=jnp.zeros((1,), jnp.float32))
    h0, c0 = run(corr_index, nei_index, hidden_state, cn, params0)
    jax.block_until_ready((h0, c0))
    h0_ref, c0_ref = reference_numpy(corr_index, nei_index, hidden_state, cn, params0)
    np.testing.assert_allclose(np.asarray(h0), h0_ref, rtol=2e-2, atol=2e-2)
    np.testing.assert_allclose(np.asarray(c0), c0_ref, rtol=2e-2, atol=2e-2)

    # no-neighbour early return path
    nei_zero = jnp.zeros((N, N), jnp.float32)
    h2, c2 = run(corr_index, nei_zero, hidden_state, cn, params)
    jax.block_until_ready((h2, c2))
    np.testing.assert_allclose(np.asarray(h2), np.asarray(hidden_state), rtol=1e-6, atol=1e-6)
    np.testing.assert_allclose(np.asarray(c2), np.asarray(cn), rtol=1e-6, atol=1e-6)

    print("KERNEL_OK")
</pallas_src>

<mosaic_0001>
module attributes {stable_mosaic.version = 11 : i64} {
  func.func @global_interaction_kernel(%arg0: i32, %arg1: memref<2xf32, #tpu.memory_space<smem>>, %arg2: memref<64x2xf32, #tpu.memory_space<vmem>>, %arg3: memref<8x1x8xf32, #tpu.memory_space<vmem>>, %arg4: memref<8x32xf32, #tpu.memory_space<vmem>>, %arg5: memref<8x32xf32, #tpu.memory_space<vmem>>, %arg6: memref<8x32xf32, #tpu.memory_space<vmem>>, %arg7: memref<3x32x32xbf16, #tpu.memory_space<vmem>>, %arg8: memref<10x32xf32, #tpu.memory_space<vmem>>, %arg9: memref<8x64xf32, #tpu.memory_space<vmem>>) attributes {dimension_semantics = [#tpu.dimension_semantics<parallel>], iteration_bounds = array<i64: 1>, scalar_prefetch = 0 : i64, scratch_operands = 0 : i64, tpu.core_type = #tpu.core_type<tc>, window_params = [{transform_indices = @transform_0, window_bounds = array<i64: 2>}, {transform_indices = @transform_1, window_bounds = array<i64: 64, 2>}, {transform_indices = @transform_2, window_bounds = array<i64: 8, 1, 8>}, {pipeline_mode = #tpu.pipeline_mode<synchronous>, transform_indices = @transform_3, window_bounds = array<i64: 8, 32>}, {pipeline_mode = #tpu.pipeline_mode<synchronous>, transform_indices = @transform_4, window_bounds = array<i64: 8, 32>}, {transform_indices = @transform_5, window_bounds = array<i64: 8, 32>}, {pipeline_mode = #tpu.pipeline_mode<synchronous>, transform_indices = @transform_6, window_bounds = array<i64: 3, 32, 32>}, {pipeline_mode = #tpu.pipeline_mode<synchronous>, transform_indices = @transform_7, window_bounds = array<i64: 10, 32>}, {transform_indices = @transform_8, window_bounds = array<i64: 8, 64>}]} {
    %c0 = arith.constant 0 : index
    %c0_0 = arith.constant 0 : index
    %0 = vector.load %arg8[%c0, %c0_0] : memref<10x32xf32, #tpu.memory_space<vmem>>, vector<10x32xf32>
    %c0_1 = arith.constant 0 : index
    %c0_2 = arith.constant 0 : index
    %1 = vector.load %arg4[%c0_1, %c0_2] : memref<8x32xf32, #tpu.memory_space<vmem>>, vector<8x32xf32>
    %c8_i32 = arith.constant 8 : i32
    %2 = arith.muli %arg0, %c8_i32 : i32
    %3 = tpu.assume_multiple %2, 8 : i32
    %4 = arith.index_cast %3 : i32 to index
    %c0_3 = arith.constant 0 : index
    %5 = vector.load %arg4[%4, %c0_3] : memref<8x32xf32, #tpu.memory_space<vmem>>, vector<8x32xf32>
    %c0_4 = arith.constant 0 : index
    %c0_5 = arith.constant 0 : index
    %6 = vector.load %arg2[%c0_4, %c0_5] : memref<64x2xf32, #tpu.memory_space<vmem>>, vector<64x2xf32>
    %7 = vector.extract_strided_slice %6 {offsets = [0, 0], sizes = [64, 1], strides = [1, 1]} : vector<64x2xf32> to vector<64x1xf32>
    %8 = vector.extract_strided_slice %0 {offsets = [0, 0], sizes = [1, 32], strides = [1, 1]} : vector<10x32xf32> to vector<1x32xf32>
    %9 = vector.broadcast %7 : vector<64x1xf32> to vector<64x32xf32>
    %10 = vector.broadcast %8 : vector<1x32xf32> to vector<64x32xf32>
    %11 = arith.mulf %9, %10 : vector<64x32xf32>
    %12 = vector.extract_strided_slice %6 {offsets = [0, 1], sizes = [64, 1], strides = [1, 1]} : vector<64x2xf32> to vector<64x1xf32>
    %13 = vector.extract_strided_slice %0 {offsets = [1, 0], sizes = [1, 32], strides = [1, 1]} : vector<10x32xf32> to vector<1x32xf32>
    %14 = vector.broadcast %12 : vector<64x1xf32> to vector<64x32xf32>
    %15 = vector.broadcast %13 : vector<1x32xf32> to vector<64x32xf32>
    %16 = arith.mulf %14, %15 : vector<64x32xf32>
    %17 = arith.addf %11, %16 : vector<64x32xf32>
    %18 = vector.extract_strided_slice %0 {offsets = [2, 0], sizes = [1, 32], strides = [1, 1]} : vector<10x32xf32> to vector<1x32xf32>
    %19 = vector.broadcast %18 : vector<1x32xf32> to vector<64x32xf32>
    %20 = arith.addf %17, %19 : vector<64x32xf32>
    %21 = vector.extract_strided_slice %0 {offsets = [3, 0], sizes = [1, 32], strides = [1, 1]} : vector<10x32xf32> to vector<1x32xf32>
    %22 = vector.extract_strided_slice %0 {offsets = [4, 0], sizes = [1, 32], strides = [1, 1]} : vector<10x32xf32> to vector<1x32xf32>
    %cst = arith.constant dense<0.000000e+00> : vector<64xf32>
    %23 = vector.multi_reduction <add>, %20, %cst [1] : vector<64x32xf32> to vector<64xf32>
    %24 = vector.shape_cast %23 : vector<64xf32> to vector<64x1xf32>
    %cst_6 = arith.constant 3.200000e+01 : f32
    %25 = vector.broadcast %cst_6 : f32 to vector<64x1xf32>
    %26 = arith.divf %24, %25 : vector<64x1xf32>
    %27 = vector.broadcast %26 : vector<64x1xf32> to vector<64x32xf32>
    %28 = arith.subf %20, %27 : vector<64x32xf32>
    %29 = arith.mulf %28, %28 : vector<64x32xf32>
    %cst_7 = arith.constant dense<0.000000e+00> : vector<64xf32>
    %30 = vector.multi_reduction <add>, %29, %cst_7 [1] : vector<64x32xf32> to vector<64xf32>
    %31 = vector.shape_cast %30 : vector<64xf32> to vector<64x1xf32>
    %cst_8 = arith.constant 3.200000e+01 : f32
    %32 = vector.broadcast %cst_8 : f32 to vector<64x1xf32>
    %33 = arith.divf %31, %32 : vector<64x1xf32>
    %cst_9 = arith.constant 9.99999974E-6 : f32
    %34 = vector.broadcast %cst_9 : f32 to vector<64x1xf32>
    %35 = arith.addf %33, %34 : vector<64x1xf32>
    %36 = math.rsqrt %35 : vector<64x1xf32>
    %37 = vector.broadcast %36 : vector<64x1xf32> to vector<64x32xf32>
    %38 = arith.mulf %28, %37 : vector<64x32xf32>
    %39 = vector.broadcast %21 : vector<1x32xf32> to vector<64x32xf32>
    %40 = arith.mulf %39, %38 : vector<64x32xf32>
    %41 = vector.broadcast %22 : vector<1x32xf32> to vector<64x32xf32>
    %42 = arith.addf %40, %41 : vector<64x32xf32>
    %cst_10 = arith.constant 0.000000e+00 : f32
    %43 = vector.broadcast %cst_10 : f32 to vector<64x32xf32>
    %44 = arith.maximumf %42, %43 : vector<64x32xf32>
    %45 = arith.truncf %44 : vector<64x32xf32> to vector<64x32xbf16>
    %c1 = arith.constant 1 : index
    %c0_11 = arith.constant 0 : index
    %c0_12 = arith.constant 0 : index
    %46 = vector.load %arg7[%c1, %c0_11, %c0_12] : memref<3x32x32xbf16, #tpu.memory_space<vmem>>, vector<1x32x32xbf16>
    %47 = vector.shape_cast %46 : vector<1x32x32xbf16> to vector<32x32xbf16>
    %cst_13 = arith.constant dense<0.000000e+00> : vector<64x32xf32>
    %48 = tpu.matmul %45, %47, %cst_13 {dimension_numbers = #tpu.dot_dimension_numbers<[1], [0], [0], [1], [0, 0, 1, 1], [], []>} : vector<64x32xbf16>, vector<32x32xbf16>, vector<64x32xf32> -> vector<64x32xf32>
    %49 = arith.truncf %5 : vector<8x32xf32> to vector<8x32xbf16>
    %c0_14 = arith.constant 0 : index
    %c0_15 = arith.constant 0 : index
    %c0_16 = arith.constant 0 : index
    %50 = vector.load %arg7[%c0_14, %c0_15, %c0_16] : memref<3x32x32xbf16, #tpu.memory_space<vmem>>, vector<1x32x32xbf16>
    %51 = vector.shape_cast %50 : vector<1x32x32xbf16> to vector<32x32xbf16>
    %cst_17 = arith.constant dense<0.000000e+00> : vector<8x32xf32>
    %52 = tpu.matmul %49, %51, %cst_17 {dimension_numbers = #tpu.dot_dimension_numbers<[1], [0], [0], [1], [0, 0, 1, 1], [], []>} : vector<8x32xbf16>, vector<32x32xbf16>, vector<8x32xf32> -> vector<8x32xf32>
    %53 = vector.shape_cast %48 : vector<64x32xf32> to vector<8x8x32xf32>
    %54 = vector.shape_cast %52 : vector<8x32xf32> to vector<8x1x32xf32>
    %55 = vector.broadcast %54 : vector<8x1x32xf32> to vector<8x8x32xf32>
    %56 = arith.addf %53, %55 : vector<8x8x32xf32>
    %c0_18 = arith.constant 0 : index
    %c0_19 = arith.constant 0 : index
    %57 = vector.load %arg5[%c0_18, %c0_19] : memref<8x32xf32, #tpu.memory_space<vmem>>, vector<8x32xf32>
    %58 = vector.shape_cast %57 : vector<8x32xf32> to vector<1x8x32xf32>
    %59 = vector.broadcast %58 : vector<1x8x32xf32> to vector<8x8x32xf32>
    %60 = arith.addf %56, %59 : vector<8x8x32xf32>
    %61 = vector.extract_strided_slice %0 {offsets = [5, 0], sizes = [1, 32], strides = [1, 1]} : vector<10x32xf32> to vector<1x32xf32>
    %62 = vector.extract_strided_slice %0 {offsets = [6, 0], sizes = [1, 32], strides = [1, 1]} : vector<10x32xf32> to vector<1x32xf32>
    %cst_20 = arith.constant dense<0.000000e+00> : vector<8x8xf32>
    %63 = vector.multi_reduction <add>, %60, %cst_20 [2] : vector<8x8x32xf32> to vector<8x8xf32>
    %64 = vector.shape_cast %63 : vector<8x8xf32> to vector<8x8x1xf32>
    %cst_21 = arith.constant 3.200000e+01 : f32
    %65 = vector.broadcast %cst_21 : f32 to vector<8x8x1xf32>
    %66 = arith.divf %64, %65 : vector<8x8x1xf32>
    %67 = vector.broadcast %66 : vector<8x8x1xf32> to vector<8x8x32xf32>
    %68 = arith.subf %60, %67 : vector<8x8x32xf32>
    %69 = arith.mulf %68, %68 : vector<8x8x32xf32>
    %cst_22 = arith.constant dense<0.000000e+00> : vector<8x8xf32>
    %70 = vector.multi_reduction <add>, %69, %cst_22 [2] : vector<8x8x32xf32> to vector<8x8xf32>
    %71 = vector.shape_cast %70 : vector<8x8xf32> to vector<8x8x1xf32>
    %cst_23 = arith.constant 3.200000e+01 : f32
    %72 = vector.broadcast %cst_23 : f32 to vector<8x8x1xf32>
    %73 = arith.divf %71, %72 : vector<8x8x1xf32>
    %cst_24 = arith.constant 9.99999974E-6 : f32
    %74 = vector.broadcast %cst_24 : f32 to vector<8x8x1xf32>
    %75 = arith.addf %73, %74 : vector<8x8x1xf32>
    %76 = math.rsqrt %75 : vector<8x8x1xf32>
    %77 = vector.broadcast %76 : vector<8x8x1xf32> to vector<8x8x32xf32>
    %78 = arith.mulf %68, %77 : vector<8x8x32xf32>
    %79 = vector.shape_cast %61 : vector<1x32xf32> to vector<1x1x32xf32>
    %80 = vector.broadcast %79 : vector<1x1x32xf32> to vector<8x8x32xf32>
    %81 = arith.mulf %80, %78 : vector<8x8x32xf32>
    %82 = vector.shape_cast %62 : vector<1x32xf32> to vector<1x1x32xf32>
    %83 = vector.broadcast %82 : vector<1x1x32xf32> to vector<8x8x32xf32>
    %84 = arith.addf %81, %83 : vector<8x8x32xf32>
    %85 = arith.negf %84 : vector<8x8x32xf32>
    %86 = math.exp %85 : vector<8x8x32xf32>
    %cst_25 = arith.constant 1.000000e+00 : f32
    %87 = vector.broadcast %cst_25 : f32 to vector<8x8x32xf32>
    %88 = arith.addf %87, %86 : vector<8x8x32xf32>
    %89 = arith.divf %87, %88 : vector<8x8x32xf32>
    %c1_26 = arith.constant 1 : index
    %90 = memref.load %arg1[%c1_26] : memref<2xf32, #tpu.memory_space<smem>>
    %cst_27 = arith.constant 0.000000e+00 : f32
    %91 = arith.maximumf %90, %cst_27 : f32
    %c0_28 = arith.constant 0 : index
    %c0_29 = arith.constant 0 : index
    %c0_30 = arith.constant 0 : index
    %92 = vector.load %arg3[%c0_28, %c0_29, %c0_30] : memref<8x1x8xf32, #tpu.memory_space<vmem>>, vector<8x1x8xf32>
    %cst_31 = arith.constant 0.000000e+00 : f32
    %93 = vector.broadcast %cst_31 : f32 to vector<8x1x8xf32>
    %94 = arith.cmpf ogt, %92, %93 : vector<8x1x8xf32>
    %cst_32 = arith.constant 1.000000e+00 : f32
    %cst_33 = arith.constant 0.000000e+00 : f32
    %95 = vector.broadcast %cst_32 : f32 to vector<8x1x8xf32>
    %96 = vector.broadcast %cst_33 : f32 to vector<8x1x8xf32>
    %97 = arith.select %94, %95, %96 : vector<8x1x8xi1>, vector<8x1x8xf32>
    %cst_34 = arith.constant dense<0.000000e+00> : vector<8x1xf32>
    %98 = vector.multi_reduction <add>, %97, %cst_34 [2] : vector<8x1x8xf32> to vector<8x1xf32>
    %99 = vector.shape_cast %98 : vector<8x1xf32> to vector<8x1x1xf32>
    %cst_35 = arith.constant 0.000000e+00 : f32
    %100 = arith.cmpf one, %91, %cst_35 : f32
    %cst_36 = arith.constant 1.000000e+00 : f32
    %101 = vector.broadcast %cst_36 : f32 to vector<8x1x1xf32>
    %102 = arith.maximumf %99, %101 : vector<8x1x1xf32>
    %cst_37 = arith.constant 8.000000e+00 : f32
    %103 = vector.broadcast %cst_37 : f32 to vector<8x1x1xf32>
    %104 = arith.select %100, %102, %103 : vector<8x1x1xf32>
    %cst_38 = arith.constant 1.000000e+00 : f32
    %105 = vector.broadcast %cst_38 : f32 to vector<8x1x1xf32>
    %106 = arith.divf %105, %104 : vector<8x1x1xf32>
    %107 = vector.shape_cast %1 : vector<8x32xf32> to vector<1x8x32xf32>
    %108 = vector.broadcast %107 : vector<1x8x32xf32> to vector<8x8x32xf32>
    %109 = arith.mulf %89, %108 : vector<8x8x32xf32>
    %110 = arith.truncf %109 : vector<8x8x32xf32> to vector<8x8x32xbf16>
    %111 = arith.truncf %97 : vector<8x1x8xf32> to vector<8x1x8xbf16>
    %cst_39 = arith.constant dense<0.000000e+00> : vector<8x1x32xf32>
    %112 = tpu.matmul %111, %110, %cst_39 {dimension_numbers = #tpu.dot_dimension_numbers<[2], [1], [1], [2], [0, 0, 0, 1, 1, 2], [0], [0]>} : vector<8x1x8xbf16>, vector<8x8x32xbf16>, vector<8x1x32xf32> -> vector<8x1x32xf32>
    %113 = vector.shape_cast %112 : vector<8x1x32xf32> to vector<8x32xf32>
    %114 = vector.shape_cast %106 : vector<8x1x1xf32> to vector<8x1xf32>
    %115 = vector.broadcast %114 : vector<8x1xf32> to vector<8x32xf32>
    %116 = arith.mulf %113, %115 : vector<8x32xf32>
    %117 = arith.truncf %116 : vector<8x32xf32> to vector<8x32xbf16>
    %c2 = arith.constant 2 : index
    %c0_40 = arith.constant 0 : index
    %c0_41 = arith.constant 0 : index
    %118 = vector.load %arg7[%c2, %c0_40, %c0_41] : memref<3x32x32xbf16, #tpu.memory_space<vmem>>, vector<1x32x32xbf16>
    %119 = vector.shape_cast %118 : vector<1x32x32xbf16> to vector<32x32xbf16>
    %cst_42 = arith.constant dense<0.000000e+00> : vector<8x32xf32>
    %120 = tpu.matmul %117, %119, %cst_42 {dimension_numbers = #tpu.dot_dimension_numbers<[1], [0], [0], [1], [0, 0, 1, 1], [], []>} : vector<8x32xbf16>, vector<32x32xbf16>, vector<8x32xf32> -> vector<8x32xf32>
    %121 = vector.extract_strided_slice %0 {offsets = [7, 0], sizes = [1, 32], strides = [1, 1]} : vector<10x32xf32> to vector<1x32xf32>
    %122 = vector.broadcast %121 : vector<1x32xf32> to vector<8x32xf32>
    %123 = arith.addf %120, %122 : vector<8x32xf32>
    %124 = vector.extract_strided_slice %0 {offsets = [8, 0], sizes = [1, 32], strides = [1, 1]} : vector<10x32xf32> to vector<1x32xf32>
    %125 = vector.extract_strided_slice %0 {offsets = [9, 0], sizes = [1, 32], strides = [1, 1]} : vector<10x32xf32> to vector<1x32xf32>
    %cst_43 = arith.constant dense<0.000000e+00> : vector<8xf32>
    %126 = vector.multi_reduction <add>, %123, %cst_43 [1] : vector<8x32xf32> to vector<8xf32>
    %127 = vector.shape_cast %126 : vector<8xf32> to vector<8x1xf32>
    %cst_44 = arith.constant 3.200000e+01 : f32
    %128 = vector.broadcast %cst_44 : f32 to vector<8x1xf32>
    %129 = arith.divf %127, %128 : vector<8x1xf32>
    %130 = vector.broadcast %129 : vector<8x1xf32> to vector<8x32xf32>
    %131 = arith.subf %123, %130 : vector<8x32xf32>
    %132 = arith.mulf %131, %131 : vector<8x32xf32>
    %cst_45 = arith.constant dense<0.000000e+00> : vector<8xf32>
    %133 = vector.multi_reduction <add>, %132, %cst_45 [1] : vector<8x32xf32> to vector<8xf32>
    %134 = vector.shape_cast %133 : vector<8xf32> to vector<8x1xf32>
    %cst_46 = arith.constant 3.200000e+01 : f32
    %135 = vector.broadcast %cst_46 : f32 to vector<8x1xf32>
    %136 = arith.divf %134, %135 : vector<8x1xf32>
    %cst_47 = arith.constant 9.99999974E-6 : f32
    %137 = vector.broadcast %cst_47 : f32 to vector<8x1xf32>
    %138 = arith.addf %136, %137 : vector<8x1xf32>
    %139 = math.rsqrt %138 : vector<8x1xf32>
    %140 = vector.broadcast %139 : vector<8x1xf32> to vector<8x32xf32>
    %141 = arith.mulf %131, %140 : vector<8x32xf32>
    %142 = vector.broadcast %124 : vector<1x32xf32> to vector<8x32xf32>
    %143 = arith.mulf %142, %141 : vector<8x32xf32>
    %144 = vector.broadcast %125 : vector<1x32xf32> to vector<8x32xf32>
    %145 = arith.addf %143, %144 : vector<8x32xf32>
    %cst_48 = arith.constant 0.000000e+00 : f32
    %146 = vector.broadcast %cst_48 : f32 to vector<8x32xf32>
    %147 = arith.maximumf %145, %146 : vector<8x32xf32>
    %c0_49 = arith.constant 0 : index
    %c0_50 = arith.constant 0 : index
    %148 = vector.load %arg6[%c0_49, %c0_50] : memref<8x32xf32, #tpu.memory_space<vmem>>, vector<8x32xf32>
    %149 = arith.addf %147, %148 : vector<8x32xf32>
    %150 = math.tanh %149 : vector<8x32xf32>
    %151 = arith.addf %5, %150 : vector<8x32xf32>
    %c0_51 = arith.constant 0 : index
    %c0_52 = arith.constant 0 : index
    %152 = vector.load %arg9[%c0_51, %c0_52] : memref<8x64xf32, #tpu.memory_space<vmem>>, vector<8x32xf32>
    tpu.vector_store %arg9[%c0_51, %c0_52], %151 {strides = array<i32>} : memref<8x64xf32, #tpu.memory_space<vmem>>, vector<8x32xf32>,
    %c0_53 = arith.constant 0 : index
    %c32 = arith.constant 32 : index
    %153 = vector.load %arg9[%c0_53, %c32] : memref<8x64xf32, #tpu.memory_space<vmem>>, vector<8x32xf32>
    tpu.vector_store %arg9[%c0_53, %c32], %149 {strides = array<i32>} : memref<8x64xf32, #tpu.memory_space<vmem>>, vector<8x32xf32>,
    return
  }
  func.func @transform_0(%arg0: i32) -> i32 {
    %c0_i32 = arith.constant 0 : i32
    %c0_i32_0 = arith.constant 0 : i32
    return %c0_i32 : i32
  }
  func.func @transform_1(%arg0: i32) -> (i32, i32) {
    %c0_i32 = arith.constant 0 : i32
    %c0_i32_0 = arith.constant 0 : i32
    return %arg0, %c0_i32 : i32, i32
  }
  func.func @transform_2(%arg0: i32) -> (i32, i32, i32) {
    %c0_i32 = arith.constant 0 : i32
    %c0_i32_0 = arith.constant 0 : i32
    %c0_i32_1 = arith.constant 0 : i32
    return %arg0, %c0_i32, %c0_i32_0 : i32, i32, i32
  }
  func.func @transform_3(%arg0: i32) -> (i32, i32) {
    %c0_i32 = arith.constant 0 : i32
    %c0_i32_0 = arith.constant 0 : i32
    %c0_i32_1 = arith.constant 0 : i32
    return %c0_i32, %c0_i32_0 : i32, i32
  }
  func.func @transform_4(%arg0: i32) -> (i32, i32) {
    %c0_i32 = arith.constant 0 : i32
    %c0_i32_0 = arith.constant 0 : i32
    %c0_i32_1 = arith.constant 0 : i32
    return %c0_i32, %c0_i32_0 : i32, i32
  }
  func.func @transform_5(%arg0: i32) -> (i32, i32) {
    %c0_i32 = arith.constant 0 : i32
    %c0_i32_0 = arith.constant 0 : i32
    return %arg0, %c0_i32 : i32, i32
  }
  func.func @transform_6(%arg0: i32) -> (i32, i32, i32) {
    %c0_i32 = arith.constant 0 : i32
    %c0_i32_0 = arith.constant 0 : i32
    %c0_i32_1 = arith.constant 0 : i32
    %c0_i32_2 = arith.constant 0 : i32
    return %c0_i32, %c0_i32_0, %c0_i32_1 : i32, i32, i32
  }
  func.func @transform_7(%arg0: i32) -> (i32, i32) {
    %c0_i32 = arith.constant 0 : i32
    %c0_i32_0 = arith.constant 0 : i32
    %c0_i32_1 = arith.constant 0 : i32
    return %c0_i32, %c0_i32_0 : i32, i32
  }
  func.func @transform_8(%arg0: i32) -> (i32, i32) {
    %c0_i32 = arith.constant 0 : i32
    %c0_i32_0 = arith.constant 0 : i32
    return %arg0, %c0_i32 : i32, i32
  }
}

</mosaic_0001>

<llo_original>
// kernel: branch_1_fun.1
$region0: #{branch_1_fun.1}
  #allocation0 [shape = 'u32[]', space=smem, size = 0x4, offset = 0x4, fixed_abs, tag = 'smem constant byte address 0x4 - core index']
  #allocation1 [shape = 'u32[72,128]{1,0:T(1,128)}', space=vmem, size = 0x9000, scoped, tag = 'internal scratch']
  %s0 = inlined_call_operand.vmem [shape: f32[2], index: 0, kind: input, shape index: {}]
  %s1 = inlined_call_operand.vmem [shape: f32[64,2], index: 1, kind: input, shape index: {}]
  %s2 = inlined_call_operand.vmem [shape: f32[8,1,8], index: 2, kind: input, shape index: {}]
  %s3 = inlined_call_operand.vmem [shape: f32[8,32], index: 3, kind: input, shape index: {}]
  %s4 = inlined_call_operand.vmem [shape: f32[8,32], index: 4, kind: input, shape index: {}]
  %s5 = inlined_call_operand.vmem [shape: f32[8,32], index: 5, kind: input, shape index: {}]
  %s6 = inlined_call_operand.vmem [shape: bf16[3,32,32], index: 6, kind: input, shape index: {}]
  %s7 = inlined_call_operand.vmem [shape: f32[10,32], index: 7, kind: input, shape index: {}]
  %s8 = inlined_call_operand.vmem [shape: f32[8,64], index: 8, kind: output, shape index: {}]
  %s9 = sld [smem:[#allocation0]]
  $region46: #{branch_1_fun.1} parent=0
    _
  %s11 = ssub.s32 1, %s9
  %s12 = scalar_select 0, %s11, %s9
  $region1: #{branch_1_fun.1} parent=0
    #allocation2 [shape = 'u8[512]{0}', space=smem, size = 0x200, scoped, tag = 'input window, operand 0, single buffered']
    #allocation3 [shape = 's32[1]{0}', space=sflag, size = 0x4, scoped, tag = 'scoped memory for branch_1_fun.1']
    %13 = vsyncpa [#allocation3], 0
    // Predicated region
    $region2: #{branch_1_fun.1} parent=1 // pred_check
      _
    $region3: #{branch_1_fun.1} parent=1 // pred_check_branch
      %15 = sbr.rel (0) target = $region5
    $region4: #{branch_1_fun.1} parent=1 // pred_region
      %17 = vsyncadd [#allocation3], 0
      %s19 = sshll.u32 %s0, 4
      %s20 = int_to_ptr.vmem [resolvable:$true] %s19
      %22 = dma.vmem_to_smem %s20, 16, [#allocation2], [#allocation3]
    $region5: #{branch_1_fun.1} parent=1 // pred_fallthru
      _
    // Predicated region
    $region6: #{branch_1_fun.1} parent=1 // pred_check
      _
    $region7: #{branch_1_fun.1} parent=1 // pred_check_branch
      %24 = sbr.rel (0) target = $region9
    $region8: #{branch_1_fun.1} parent=1 // pred_region
      _
    $region9: #{branch_1_fun.1} parent=1 // pred_fallthru
      _
    // Predicated region
    $region10: #{branch_1_fun.1} parent=1 // pred_check
      _
    $region11: #{branch_1_fun.1} parent=1 // pred_check_branch
      %26 = sbr.rel (0) target = $region13
    $region12: #{branch_1_fun.1} parent=1 // pred_region
      _
    $region13: #{branch_1_fun.1} parent=1 // pred_fallthru
      _
    // Predicated region
    $region14: #{branch_1_fun.1} parent=1 // pred_check
      _
    $region15: #{branch_1_fun.1} parent=1 // pred_check_branch
      %28 = sbr.rel (0) target = $region17
    $region16: #{branch_1_fun.1} parent=1 // pred_region
      _
    $region17: #{branch_1_fun.1} parent=1 // pred_fallthru
      _
    // Predicated region
    $region18: #{branch_1_fun.1} parent=1 // pred_check
      _
    $region19: #{branch_1_fun.1} parent=1 // pred_check_branch
      %30 = sbr.rel (0) target = $region21
    $region20: #{branch_1_fun.1} parent=1 // pred_region
      _
    $region21: #{branch_1_fun.1} parent=1 // pred_fallthru
      _
    // Predicated region
    $region22: #{branch_1_fun.1} parent=1 // pred_check
      _
    $region23: #{branch_1_fun.1} parent=1 // pred_check_branch
      %32 = sbr.rel (0) target = $region25
    $region24: #{branch_1_fun.1} parent=1 // pred_region
      _
    $region25: #{branch_1_fun.1} parent=1 // pred_fallthru
      _
    // Predicated region
    $region26: #{branch_1_fun.1} parent=1 // pred_check
      _
    $region27: #{branch_1_fun.1} parent=1 // pred_check_branch
      %34 = sbr.rel (0) target = $region29
    $region28: #{branch_1_fun.1} parent=1 // pred_region
      _
    $region29: #{branch_1_fun.1} parent=1 // pred_fallthru
      _
    // Predicated region
    $region30: #{branch_1_fun.1} parent=1 // pred_check
      _
    $region31: #{branch_1_fun.1} parent=1 // pred_check_branch
      %36 = sbr.rel (0) target = $region33
    $region32: #{branch_1_fun.1} parent=1 // pred_region
      _
    $region33: #{branch_1_fun.1} parent=1 // pred_fallthru
      _
    // Predicated region
    $region34: #{branch_1_fun.1} parent=1 // pred_check
      _
    $region35: #{branch_1_fun.1} parent=1 // pred_check_branch
      %38 = sbr.rel (0) target = $region37
    $region36: #{branch_1_fun.1} parent=1 // pred_region
      %40 = dma.done [#allocation3], 16
    $region37: #{branch_1_fun.1} parent=1 // pred_fallthru
      _
    %41 = sfence
    %v43 = vld [vmem:[%s7] sm:$0xff]
    %v44 = vld [vmem:[%s7 + $0x8] sm:$0x3]
    %v45 = vld [vmem:[%s3] sm:$0xff]
    %s46 = smul.u32 0, 8
    %s47 = scalar_lea.vmem %s3, %s46
    %v48 = vld [vmem:[%s47] sm:$0xff]
    %v49 = vld [vmem:[%s1] sm:$0xff]
    %v50 = vld [vmem:[%s1 + $0x8] sm:$0xff]
    %v51 = vld [vmem:[%s1 + $0x10] sm:$0xff]
    %v52 = vld [vmem:[%s1 + $0x18] sm:$0xff]
    %v53 = vld [vmem:[%s1 + $0x20] sm:$0xff]
    %v54 = vld [vmem:[%s1 + $0x28] sm:$0xff]
    %v55 = vld [vmem:[%s1 + $0x30] sm:$0xff]
    %v56 = vld [vmem:[%s1 + $0x38] sm:$0xff]
    %58 = vset.pattern.permute.xlu0 0
    %59 = vperm.xlu0 %58, %v49
    %v60 = vpop.permute.xlu0 %59
    %63 = vset.pattern.permute.xlu0 0
    %64 = vperm.xlu0 %63, %v50
    %v65 = vpop.permute.xlu0 %64
    %68 = vset.pattern.permute.xlu0 0
    %69 = vperm.xlu0 %68, %v51
    %v70 = vpop.permute.xlu0 %69
    %73 = vset.pattern.permute.xlu0 0
    %74 = vperm.xlu0 %73, %v52
    %v75 = vpop.permute.xlu0 %74
    %78 = vset.pattern.permute.xlu0 0
    %79 = vperm.xlu0 %78, %v53
    %v80 = vpop.permute.xlu0 %79
    %83 = vset.pattern.permute.xlu0 0
    %84 = vperm.xlu0 %83, %v54
    %v85 = vpop.permute.xlu0 %84
    %88 = vset.pattern.permute.xlu0 0
    %89 = vperm.xlu0 %88, %v55
    %v90 = vpop.permute.xlu0 %89
    %93 = vset.pattern.permute.xlu0 0
    %94 = vperm.xlu0 %93, %v56
    %v95 = vpop.permute.xlu0 %94
    %v97 = vperm.slane %v43, 0
    %v98 = vmul.f32 %v60, %v97
    %v99 = vmul.f32 %v65, %v97
    %v100 = vmul.f32 %v70, %v97
    %v101 = vmul.f32 %v75, %v97
    %v102 = vmul.f32 %v80, %v97
    %v103 = vmul.f32 %v85, %v97
    %v104 = vmul.f32 %v90, %v97
    %v105 = vmul.f32 %v95, %v97
    %106 = vset.pattern.permute.xlu0 1
    %107 = vperm.xlu0 %106, %v49
    %v108 = vpop.permute.xlu0 %107
    %110 = vset.pattern.permute.xlu0 1
    %111 = vperm.xlu0 %110, %v50
    %v112 = vpop.permute.xlu0 %111
    %114 = vset.pattern.permute.xlu0 1
    %115 = vperm.xlu0 %114, %v51
    %v116 = vpop.permute.xlu0 %115
    %118 = vset.pattern.permute.xlu0 1
    %119 = vperm.xlu0 %118, %v52
    %v120 = vpop.permute.xlu0 %119
    %122 = vset.pattern.permute.xlu0 1
    %123 = vperm.xlu0 %122, %v53
    %v124 = vpop.permute.xlu0 %123
    %126 = vset.pattern.permute.xlu0 1
    %127 = vperm.xlu0 %126, %v54
    %v128 = vpop.permute.xlu0 %127
    %130 = vset.pattern.permute.xlu0 1
    %131 = vperm.xlu0 %130, %v55
    %v132 = vpop.permute.xlu0 %131
    %134 = vset.pattern.permute.xlu0 1
    %135 = vperm.xlu0 %134, %v56
    %v136 = vpop.permute.xlu0 %135
    %v138 = vperm.slane %v43, 1
    %v139 = vmul.f32 %v108, %v138
    %v140 = vmul.f32 %v112, %v138
    %v141 = vmul.f32 %v116, %v138
    %v142 = vmul.f32 %v120, %v138
    %v143 = vmul.f32 %v124, %v138
    %v144 = vmul.f32 %v128, %v138
    %v145 = vmul.f32 %v132, %v138
    %v146 = vmul.f32 %v136, %v138
    %v147 = vadd.f32 %v98, %v139
    %v148 = vadd.f32 %v99, %v140
    %v149 = vadd.f32 %v100, %v141
    %v150 = vadd.f32 %v101, %v142
    %v151 = vadd.f32 %v102, %v143
    %v152 = vadd.f32 %v103, %v144
    %v153 = vadd.f32 %v104, %v145
    %v154 = vadd.f32 %v105, %v146
    %v155 = vperm.slane %v43, 2
    %v156 = vadd.f32 %v147, %v155
    %v157 = vadd.f32 %v148, %v155
    %v158 = vadd.f32 %v149, %v155
    %v159 = vadd.f32 %v150, %v155
    %v160 = vadd.f32 %v151, %v155
    %v161 = vadd.f32 %v152, %v155
    %v162 = vadd.f32 %v153, %v155
    %v163 = vadd.f32 %v154, %v155
    %vm164 = vcmask 261120
    %v165 = vsel %vm164, %v156, 0.0
    %166 = vadd.xlane.f32.xlu0 %v165
    %v167 = vpop.xlane.xlu0 %166
    %v168 = vsel %vm164, %v157, 0.0
    %169 = vadd.xlane.f32.xlu0 %v168
    %v170 = vpop.xlane.xlu0 %169
    %v171 = vsel %vm164, %v158, 0.0
    %172 = vadd.xlane.f32.xlu0 %v171
    %v173 = vpop.xlane.xlu0 %172
    %v174 = vsel %vm164, %v159, 0.0
    %175 = vadd.xlane.f32.xlu0 %v174
    %v176 = vpop.xlane.xlu0 %175
    %v177 = vsel %vm164, %v160, 0.0
    %178 = vadd.xlane.f32.xlu0 %v177
    %v179 = vpop.xlane.xlu0 %178
    %v180 = vsel %vm164, %v161, 0.0
    %181 = vadd.xlane.f32.xlu0 %v180
    %v182 = vpop.xlane.xlu0 %181
    %v183 = vsel %vm164, %v162, 0.0
    %184 = vadd.xlane.f32.xlu0 %v183
    %v185 = vpop.xlane.xlu0 %184
    %v186 = vsel %vm164, %v163, 0.0
    %187 = vadd.xlane.f32.xlu0 %v186
    %v188 = vpop.xlane.xlu0 %187
    %v189 = vrcp.pop 32.0
    %v190 = vmul.f32 32.0, %v189
    %v191 = vsub.f32 1.0, %v190
    %v192 = vmul.f32 %v189, %v191
    %v193 = vadd.f32 %v189, %v192
    %vm194 = vweird.f32 %v189
    %v195 = vsel %vm194, %v189, %v193
    %v196 = vmul.f32 %v167, %v195
    %v197 = vmul.f32 %v170, %v195
    %v198 = vmul.f32 %v173, %v195
    %v199 = vmul.f32 %v176, %v195
    %v200 = vmul.f32 %v179, %v195
    %v201 = vmul.f32 %v182, %v195
    %v202 = vmul.f32 %v185, %v195
    %v203 = vmul.f32 %v188, %v195
    %v204 = vsub.f32 %v156, %v196
    %v205 = vsub.f32 %v157, %v197
    %v206 = vsub.f32 %v158, %v198
    %v207 = vsub.f32 %v159, %v199
    %v208 = vsub.f32 %v160, %v200
    %v209 = vsub.f32 %v161, %v201
    %v210 = vsub.f32 %v162, %v202
    %v211 = vsub.f32 %v163, %v203
    %v212 = vmul.f32 %v204, %v204
    %v213 = vmul.f32 %v205, %v205
    %v214 = vmul.f32 %v206, %v206
    %v215 = vmul.f32 %v207, %v207
    %v216 = vmul.f32 %v208, %v208
    %v217 = vmul.f32 %v209, %v209
    %v218 = vmul.f32 %v210, %v210
    %v219 = vmul.f32 %v211, %v211
    %v220 = vsel %vm164, %v212, 0.0
    %221 = vadd.xlane.f32.xlu0 %v220
    %v222 = vpop.xlane.xlu0 %221
    %v223 = vsel %vm164, %v213, 0.0
    %224 = vadd.xlane.f32.xlu0 %v223
    %v225 = vpop.xlane.xlu0 %224
    %v226 = vsel %vm164, %v214, 0.0
    %227 = vadd.xlane.f32.xlu0 %v226
    %v228 = vpop.xlane.xlu0 %227
    %v229 = vsel %vm164, %v215, 0.0
    %230 = vadd.xlane.f32.xlu0 %v229
    %v231 = vpop.xlane.xlu0 %230
    %v232 = vsel %vm164, %v216, 0.0
    %233 = vadd.xlane.f32.xlu0 %v232
    %v234 = vpop.xlane.xlu0 %233
    %v235 = vsel %vm164, %v217, 0.0
    %236 = vadd.xlane.f32.xlu0 %v235
    %v237 = vpop.xlane.xlu0 %236
    %v238 = vsel %vm164, %v218, 0.0
    %239 = vadd.xlane.f32.xlu0 %v238
    %v240 = vpop.xlane.xlu0 %239
    %v241 = vsel %vm164, %v219, 0.0
    %242 = vadd.xlane.f32.xlu0 %v241
    %v243 = vpop.xlane.xlu0 %242
    %v244 = vmul.f32 %v222, %v195
    %v245 = vmul.f32 %v225, %v195
    %v246 = vmul.f32 %v228, %v195
    %v247 = vmul.f32 %v231, %v195
    %v248 = vmul.f32 %v234, %v195
    %v249 = vmul.f32 %v237, %v195
    %v250 = vmul.f32 %v240, %v195
    %v251 = vmul.f32 %v243, %v195
    %v252 = vadd.f32 %v244, 1e-05
    %v253 = vadd.f32 %v245, 1e-05
    %v254 = vadd.f32 %v246, 1e-05
    %v255 = vadd.f32 %v247, 1e-05
    %v256 = vadd.f32 %v248, 1e-05
    %v257 = vadd.f32 %v249, 1e-05
    %v258 = vadd.f32 %v250, 1e-05
    %v259 = vadd.f32 %v251, 1e-05
    %v260 = vrsqrt.pop %v252
    %v261 = vmul.f32 %v260, %v252
    %v262 = vmul.f32 %v261, %v260
    %v263 = vmul.f32 0.5, %v262
    %v264 = vsub.f32 1.5, %v263
    %v265 = vmul.f32 %v260, %v264
    %vm266 = vweird.f32 %v252
    %vm267 = vweird.f32 %v260
    %vm268 = vmor %vm266, %vm267
    %v269 = vsel %vm268, %v260, %v265
    %v270 = vrsqrt.pop %v253
    %v271 = vmul.f32 %v270, %v253
    %v272 = vmul.f32 %v271, %v270
    %v273 = vmul.f32 0.5, %v272
    %v274 = vsub.f32 1.5, %v273
    %v275 = vmul.f32 %v270, %v274
    %vm276 = vweird.f32 %v253
    %vm277 = vweird.f32 %v270
    %vm278 = vmor %vm276, %vm277
    %v279 = vsel %vm278, %v270, %v275
    %v280 = vrsqrt.pop %v254
    %v281 = vmul.f32 %v280, %v254
    %v282 = vmul.f32 %v281, %v280
    %v283 = vmul.f32 0.5, %v282
    %v284 = vsub.f32 1.5, %v283
    %v285 = vmul.f32 %v280, %v284
    %vm286 = vweird.f32 %v254
    %vm287 = vweird.f32 %v280
    %vm288 = vmor %vm286, %vm287
    %v289 = vsel %vm288, %v280, %v285
    %v290 = vrsqrt.pop %v255
    %v291 = vmul.f32 %v290, %v255
    %v292 = vmul.f32 %v291, %v290
    %v293 = vmul.f32 0.5, %v292
    %v294 = vsub.f32 1.5, %v293
    %v295 = vmul.f32 %v290, %v294
    %vm296 = vweird.f32 %v255
    %vm297 = vweird.f32 %v290
    %vm298 = vmor %vm296, %vm297
    %v299 = vsel %vm298, %v290, %v295
    %v300 = vrsqrt.pop %v256
    %v301 = vmul.f32 %v300, %v256
    %v302 = vmul.f32 %v301, %v300
    %v303 = vmul.f32 0.5, %v302
    %v304 = vsub.f32 1.5, %v303
    %v305 = vmul.f32 %v300, %v304
    %vm306 = vweird.f32 %v256
    %vm307 = vweird.f32 %v300
    %vm308 = vmor %vm306, %vm307
    %v309 = vsel %vm308, %v300, %v305
    %v310 = vrsqrt.pop %v257
    %v311 = vmul.f32 %v310, %v257
    %v312 = vmul.f32 %v311, %v310
    %v313 = vmul.f32 0.5, %v312
    %v314 = vsub.f32 1.5, %v313
    %v315 = vmul.f32 %v310, %v314
    %vm316 = vweird.f32 %v257
    %vm317 = vweird.f32 %v310
    %vm318 = vmor %vm316, %vm317
    %v319 = vsel %vm318, %v310, %v315
    %v320 = vrsqrt.pop %v258
    %v321 = vmul.f32 %v320, %v258
    %v322 = vmul.f32 %v321, %v320
    %v323 = vmul.f32 0.5, %v322
    %v324 = vsub.f32 1.5, %v323
    %v325 = vmul.f32 %v320, %v324
    %vm326 = vweird.f32 %v258
    %vm327 = vweird.f32 %v320
    %vm328 = vmor %vm326, %vm327
    %v329 = vsel %vm328, %v320, %v325
    %v330 = vrsqrt.pop %v259
    %v331 = vmul.f32 %v330, %v259
    %v332 = vmul.f32 %v331, %v330
    %v333 = vmul.f32 0.5, %v332
    %v334 = vsub.f32 1.5, %v333
    %v335 = vmul.f32 %v330, %v334
    %vm336 = vweird.f32 %v259
    %vm337 = vweird.f32 %v330
    %vm338 = vmor %vm336, %vm337
    %v339 = vsel %vm338, %v330, %v335
    %v340 = vmul.f32 %v204, %v269
    %v341 = vmul.f32 %v205, %v279
    %v342 = vmul.f32 %v206, %v289
    %v343 = vmul.f32 %v207, %v299
    %v344 = vmul.f32 %v208, %v309
    %v345 = vmul.f32 %v209, %v319
    %v346 = vmul.f32 %v210, %v329
    %v347 = vmul.f32 %v211, %v339
    %v348 = vperm.slane %v43, 3
    %v349 = vmul.f32 %v348, %v340
    %v350 = vmul.f32 %v348, %v341
    %v351 = vmul.f32 %v348, %v342
    %v352 = vmul.f32 %v348, %v343
    %v353 = vmul.f32 %v348, %v344
    %v354 = vmul.f32 %v348, %v345
    %v355 = vmul.f32 %v348, %v346
    %v356 = vmul.f32 %v348, %v347
    %v357 = vperm.slane %v43, 4
    %v358 = vadd.f32 %v349, %v357
    %v359 = vadd.f32 %v350, %v357
    %v360 = vadd.f32 %v351, %v357
    %v361 = vadd.f32 %v352, %v357
    %v362 = vadd.f32 %v353, %v357
    %v363 = vadd.f32 %v354, %v357
    %v364 = vadd.f32 %v355, %v357
    %v365 = vadd.f32 %v356, %v357
    %v366 = vmax.f32 %v358, 0.0
    %v367 = vmax.f32 %v359, 0.0
    %v368 = vmax.f32 %v360, 0.0
    %v369 = vmax.f32 %v361, 0.0
    %v370 = vmax.f32 %v362, 0.0
    %v371 = vmax.f32 %v363, 0.0
    %v372 = vmax.f32 %v364, 0.0
    %v373 = vmax.f32 %v365, 0.0
    %v374 = vpack.c.bf16 %v367, %v366
    %v375 = vpack.c.bf16 %v369, %v368
    %v376 = vpack.c.bf16 %v371, %v370
    %v377 = vpack.c.bf16 %v373, %v372
    %s378 = scalar_lea.vmem %s6, 16
    %v379 = vld [vmem:[%s378] sm:$0xf]
    %v380 = vld [vmem:[%s378 + $0x4] sm:$0xf]
    %v381 = vld [vmem:[%s378 + $0x8] sm:$0xf]
    %v382 = vld [vmem:[%s378 + $0xc] sm:$0xf]
    %v387 = vunpack.c.l.b16 %v379
    %v388 = vunpack.c.l.b16 %v380
    %v389 = vunpack.c.l.b16 %v381
    %v390 = vunpack.c.l.b16 %v382
    %v391 = vpack.c.b16 %v388, %v387
    %v392 = vpack.c.b16 %v390, %v389
    %v396 = vsel %vm164, %v374, 0
    %v399 = vsel %vm164, %v375, 0
    %v402 = vsel %vm164, %v376, 0
    %v405 = vsel %vm164, %v377, 0
    %407 = vmatpush.bf16.msra.mxu0 0
    %408 = vmatpush.bf16.msra.mxu0 0
    %409 = vmatpush.bf16.msra.mxu0 0
    %410 = vmatpush.bf16.msra.mxu0 0
    %411 = vmatpush.bf16.msra.mxu0 0
    %412 = vmatpush.bf16.msra.mxu0 0
    %413 = vmatpush.bf16.msra.mxu0 %v392
    %414 = vmatpush.bf16.msra.mxu0 %v391
    %415 = vmatmul.bf16.gmra.mxu0 %v396
    %v416 = vpop.f32.mrf.mxu0
    %v417 = vadd.f32 0.0, %v416
    %v418 = vpop.f32.mrf.mxu0
    %v419 = vadd.f32 0.0, %v418
    %420 = vmatmul.bf16.gmra.mxu0 %v399
    %v421 = vpop.f32.mrf.mxu0
    %v422 = vadd.f32 0.0, %v421
    %v423 = vpop.f32.mrf.mxu0
    %v424 = vadd.f32 0.0, %v423
    %425 = vmatmul.bf16.gmra.mxu0 %v402
    %v426 = vpop.f32.mrf.mxu0
    %v427 = vadd.f32 0.0, %v426
    %v428 = vpop.f32.mrf.mxu0
    %v429 = vadd.f32 0.0, %v428
    %430 = vmatmul.bf16.gmra.mxu0 %v405
    %v431 = vpop.f32.mrf.mxu0
    %v432 = vadd.f32 0.0, %v431
    %v433 = vpop.f32.mrf.mxu0
    %v434 = vadd.f32 0.0, %v433
    %435 = vdwg.mxu0
    %v436 = vpack.c.bf16 %v48, %v48
    %v437 = vld [vmem:[%s6] sm:$0xf]
    %v438 = vld [vmem:[%s6 + $0x4] sm:$0xf]
    %v439 = vld [vmem:[%s6 + $0x8] sm:$0xf]
    %v440 = vld [vmem:[%s6 + $0xc] sm:$0xf]
    %v445 = vunpack.c.l.b16 %v437
    %v446 = vunpack.c.l.b16 %v438
    %v447 = vunpack.c.l.b16 %v439
    %v448 = vunpack.c.l.b16 %v440
    %v449 = vpack.c.b16 %v446, %v445
    %v450 = vpack.c.b16 %v448, %v447
    %v454 = vsel %vm164, %v436, 0
    %456 = vmatpush.bf16.msra.mxu0 0
    %457 = vmatpush.bf16.msra.mxu0 0
    %458 = vmatpush.bf16.msra.mxu0 0
    %459 = vmatpush.bf16.msra.mxu0 0
    %460 = vmatpush.bf16.msra.mxu0 0
    %461 = vmatpush.bf16.msra.mxu0 0
    %462 = vmatpush.bf16.msra.mxu0 %v450
    %463 = vmatpush.bf16.msra.mxu0 %v449
    %464 = vmatmul.bf16.gmra.mxu0 %v454
    %v465 = vpop.f32.mrf.mxu0
    %v466 = vadd.f32 0.0, %v465
    %v467 = vpop.f32.mrf.mxu0
    %468 = vdwg.mxu0
    %v470 = vrot.slane %v466, 1
    %v471 = vrot.slane %v466, 2
    %v472 = vrot.slane %v466, 3
    %v473 = vrot.slane %v466, 4
    %v474 = vrot.slane %v466, 5
    %v475 = vrot.slane %v466, 6
    %v476 = vrot.slane %v466, 7
    %v477 = vperm.slane %v466, 0
    %v478 = vperm.slane %v470, 0
    %v479 = vperm.slane %v471, 0
    %v480 = vperm.slane %v472, 0
    %v481 = vperm.slane %v473, 0
    %v482 = vperm.slane %v474, 0
    %v483 = vperm.slane %v475, 0
    %v484 = vperm.slane %v476, 0
    %v493 = vadd.f32 %v417, %v477
    %v494 = vadd.f32 %v419, %v478
    %v495 = vadd.f32 %v422, %v479
    %v496 = vadd.f32 %v424, %v480
    %v497 = vadd.f32 %v427, %v481
    %v498 = vadd.f32 %v429, %v482
    %v499 = vadd.f32 %v432, %v483
    %v500 = vadd.f32 %v434, %v484
    %v501 = vld [vmem:[%s4] sm:$0xff]
    %v502 = vadd.f32 %v493, %v501
    %v503 = vadd.f32 %v494, %v501
    %v504 = vadd.f32 %v495, %v501
    %v505 = vadd.f32 %v496, %v501
    %v506 = vadd.f32 %v497, %v501
    %v507 = vadd.f32 %v498, %v501
    %v508 = vadd.f32 %v499, %v501
    %v509 = vadd.f32 %v500, %v501
    %v510 = vsel %vm164, %v502, 0.0
    %511 = vadd.xlane.f32.xlu0 %v510
    %v512 = vpop.xlane.xlu0 %511
    %v513 = vsel %vm164, %v503, 0.0
    %514 = vadd.xlane.f32.xlu0 %v513
    %v515 = vpop.xlane.xlu0 %514
    %v516 = vsel %vm164, %v504, 0.0
    %517 = vadd.xlane.f32.xlu0 %v516
    %v518 = vpop.xlane.xlu0 %517
    %v519 = vsel %vm164, %v505, 0.0
    %520 = vadd.xlane.f32.xlu0 %v519
    %v521 = vpop.xlane.xlu0 %520
    %v522 = vsel %vm164, %v506, 0.0
    %523 = vadd.xlane.f32.xlu0 %v522
    %v524 = vpop.xlane.xlu0 %523
    %v525 = vsel %vm164, %v507, 0.0
    %526 = vadd.xlane.f32.xlu0 %v525
    %v527 = vpop.xlane.xlu0 %526
    %v528 = vsel %vm164, %v508, 0.0
    %529 = vadd.xlane.f32.xlu0 %v528
    %v530 = vpop.xlane.xlu0 %529
    %v531 = vsel %vm164, %v509, 0.0
    %532 = vadd.xlane.f32.xlu0 %v531
    %v533 = vpop.xlane.xlu0 %532
    %v534 = vmul.f32 %v512, %v195
    %v535 = vmul.f32 %v515, %v195
    %v536 = vmul.f32 %v518, %v195
    %v537 = vmul.f32 %v521, %v195
    %v538 = vmul.f32 %v524, %v195
    %v539 = vmul.f32 %v527, %v195
    %v540 = vmul.f32 %v530, %v195
    %v541 = vmul.f32 %v533, %v195
    %v542 = vsub.f32 %v502, %v534
    %v543 = vsub.f32 %v503, %v535
    %v544 = vsub.f32 %v504, %v536
    %v545 = vsub.f32 %v505, %v537
    %v546 = vsub.f32 %v506, %v538
    %v547 = vsub.f32 %v507, %v539
    %v548 = vsub.f32 %v508, %v540
    %v549 = vsub.f32 %v509, %v541
    %v550 = vmul.f32 %v542, %v542
    %v551 = vmul.f32 %v543, %v543
    %v552 = vmul.f32 %v544, %v544
    %v553 = vmul.f32 %v545, %v545
    %v554 = vmul.f32 %v546, %v546
    %v555 = vmul.f32 %v547, %v547
    %v556 = vmul.f32 %v548, %v548
    %v557 = vmul.f32 %v549, %v549
    %v558 = vsel %vm164, %v550, 0.0
    %559 = vadd.xlane.f32.xlu0 %v558
    %v560 = vpop.xlane.xlu0 %559
    %v561 = vsel %vm164, %v551, 0.0
    %562 = vadd.xlane.f32.xlu0 %v561
    %v563 = vpop.xlane.xlu0 %562
    %v564 = vsel %vm164, %v552, 0.0
    %565 = vadd.xlane.f32.xlu0 %v564
    %v566 = vpop.xlane.xlu0 %565
    %v567 = vsel %vm164, %v553, 0.0
    %568 = vadd.xlane.f32.xlu0 %v567
    %v569 = vpop.xlane.xlu0 %568
    %v570 = vsel %vm164, %v554, 0.0
    %571 = vadd.xlane.f32.xlu0 %v570
    %v572 = vpop.xlane.xlu0 %571
    %v573 = vsel %vm164, %v555, 0.0
    %574 = vadd.xlane.f32.xlu0 %v573
    %v575 = vpop.xlane.xlu0 %574
    %v576 = vsel %vm164, %v556, 0.0
    %577 = vadd.xlane.f32.xlu0 %v576
    %v578 = vpop.xlane.xlu0 %577
    %v579 = vsel %vm164, %v557, 0.0
    %580 = vadd.xlane.f32.xlu0 %v579
    %v581 = vpop.xlane.xlu0 %580
    %v582 = vmul.f32 %v560, %v195
    %v583 = vmul.f32 %v563, %v195
    %v584 = vmul.f32 %v566, %v195
    %v585 = vmul.f32 %v569, %v195
    %v586 = vmul.f32 %v572, %v195
    %v587 = vmul.f32 %v575, %v195
    %v588 = vmul.f32 %v578, %v195
    %v589 = vmul.f32 %v581, %v195
    %v590 = vadd.f32 %v582, 1e-05
    %v591 = vadd.f32 %v583, 1e-05
    %v592 = vadd.f32 %v584, 1e-05
    %v593 = vadd.f32 %v585, 1e-05
    %v594 = vadd.f32 %v586, 1e-05
    %v595 = vadd.f32 %v587, 1e-05
    %v596 = vadd.f32 %v588, 1e-05
    %v597 = vadd.f32 %v589, 1e-05
    %v598 = vrsqrt.pop %v590
    %v599 = vmul.f32 %v598, %v590
    %v600 = vmul.f32 %v599, %v598
    %v601 = vmul.f32 0.5, %v600
    %v602 = vsub.f32 1.5, %v601
    %v603 = vmul.f32 %v598, %v602
    %vm604 = vweird.f32 %v590
    %vm605 = vweird.f32 %v598
    %vm606 = vmor %vm604, %vm605
    %v607 = vsel %vm606, %v598, %v603
    %v608 = vrsqrt.pop %v591
    %v609 = vmul.f32 %v608, %v591
    %v610 = vmul.f32 %v609, %v608
    %v611 = vmul.f32 0.5, %v610
    %v612 = vsub.f32 1.5, %v611
    %v613 = vmul.f32 %v608, %v612
    %vm614 = vweird.f32 %v591
    %vm615 = vweird.f32 %v608
    %vm616 = vmor %vm614, %vm615
    %v617 = vsel %vm616, %v608, %v613
    %v618 = vrsqrt.pop %v592
    %v619 = vmul.f32 %v618, %v592
    %v620 = vmul.f32 %v619, %v618
    %v621 = vmul.f32 0.5, %v620
    %v622 = vsub.f32 1.5, %v621
    %v623 = vmul.f32 %v618, %v622
    %vm624 = vweird.f32 %v592
    %vm625 = vweird.f32 %v618
    %vm626 = vmor %vm624, %vm625
    %v627 = vsel %vm626, %v618, %v623
    %v628 = vrsqrt.pop %v593
    %v629 = vmul.f32 %v628, %v593
    %v630 = vmul.f32 %v629, %v628
    %v631 = vmul.f32 0.5, %v630
    %v632 = vsub.f32 1.5, %v631
    %v633 = vmul.f32 %v628, %v632
    %vm634 = vweird.f32 %v593
    %vm635 = vweird.f32 %v628
    %vm636 = vmor %vm634, %vm635
    %v637 = vsel %vm636, %v628, %v633
    %v638 = vrsqrt.pop %v594
    %v639 = vmul.f32 %v638, %v594
    %v640 = vmul.f32 %v639, %v638
    %v641 = vmul.f32 0.5, %v640
    %v642 = vsub.f32 1.5, %v641
    %v643 = vmul.f32 %v638, %v642
    %vm644 = vweird.f32 %v594
    %vm645 = vweird.f32 %v638
    %vm646 = vmor %vm644, %vm645
    %v647 = vsel %vm646, %v638, %v643
    %v648 = vrsqrt.pop %v595
    %v649 = vmul.f32 %v648, %v595
    %v650 = vmul.f32 %v649, %v648
    %v651 = vmul.f32 0.5, %v650
    %v652 = vsub.f32 1.5, %v651
    %v653 = vmul.f32 %v648, %v652
    %vm654 = vweird.f32 %v595
    %vm655 = vweird.f32 %v648
    %vm656 = vmor %vm654, %vm655
    %v657 = vsel %vm656, %v648, %v653
    %v658 = vrsqrt.pop %v596
    %v659 = vmul.f32 %v658, %v596
    %v660 = vmul.f32 %v659, %v658
    %v661 = vmul.f32 0.5, %v660
    %v662 = vsub.f32 1.5, %v661
    %v663 = vmul.f32 %v658, %v662
    %vm664 = vweird.f32 %v596
    %vm665 = vweird.f32 %v658
    %vm666 = vmor %vm664, %vm665
    %v667 = vsel %vm666, %v658, %v663
    %v668 = vrsqrt.pop %v597
    %v669 = vmul.f32 %v668, %v597
    %v670 = vmul.f32 %v669, %v668
    %v671 = vmul.f32 0.5, %v670
    %v672 = vsub.f32 1.5, %v671
    %v673 = vmul.f32 %v668, %v672
    %vm674 = vweird.f32 %v597
    %vm675 = vweird.f32 %v668
    %vm676 = vmor %vm674, %vm675
    %v677 = vsel %vm676, %v668, %v673
    %v678 = vmul.f32 %v542, %v607
    %v679 = vmul.f32 %v543, %v617
    %v680 = vmul.f32 %v544, %v627
    %v681 = vmul.f32 %v545, %v637
    %v682 = vmul.f32 %v546, %v647
    %v683 = vmul.f32 %v547, %v657
    %v684 = vmul.f32 %v548, %v667
    %v685 = vmul.f32 %v549, %v677
    %v686 = vperm.slane %v43, 5
    %v687 = vmul.f32 %v686, %v678
    %v688 = vmul.f32 %v686, %v679
    %v689 = vmul.f32 %v686, %v680
    %v690 = vmul.f32 %v686, %v681
    %v691 = vmul.f32 %v686, %v682
    %v692 = vmul.f32 %v686, %v683
    %v693 = vmul.f32 %v686, %v684
    %v694 = vmul.f32 %v686, %v685
    %v695 = vperm.slane %v43, 6
    %v696 = vadd.f32 %v687, %v695
    %v697 = vadd.f32 %v688, %v695
    %v698 = vadd.f32 %v689, %v695
    %v699 = vadd.f32 %v690, %v695
    %v700 = vadd.f32 %v691, %v695
    %v701 = vadd.f32 %v692, %v695
    %v702 = vadd.f32 %v693, %v695
    %v703 = vadd.f32 %v694, %v695
    %v704 = vxor.u32 %v696, 2147483648
    %v705 = vxor.u32 %v697, 2147483648
    %v706 = vxor.u32 %v698, 2147483648
    %v707 = vxor.u32 %v699, 2147483648
    %v708 = vxor.u32 %v700, 2147483648
    %v709 = vxor.u32 %v701, 2147483648
    %v710 = vxor.u32 %v702, 2147483648
    %v711 = vxor.u32 %v703, 2147483648
    %v712 = vmul.f32 %v704, 1.442695
    %v713 = vpow.pop %v712
    %v714 = vmul.f32 %v705, 1.442695
    %v715 = vpow.pop %v714
    %v716 = vmul.f32 %v706, 1.442695
    %v717 = vpow.pop %v716
    %v718 = vmul.f32 %v707, 1.442695
    %v719 = vpow.pop %v718
    %v720 = vmul.f32 %v708, 1.442695
    %v721 = vpow.pop %v720
    %v722 = vmul.f32 %v709, 1.442695
    %v723 = vpow.pop %v722
    %v724 = vmul.f32 %v710, 1.442695
    %v725 = vpow.pop %v724
    %v726 = vmul.f32 %v711, 1.442695
    %v727 = vpow.pop %v726
    %v728 = vadd.f32 %v713, 1.0
    %v729 = vadd.f32 %v715, 1.0
    %v730 = vadd.f32 %v717, 1.0
    %v731 = vadd.f32 %v719, 1.0
    %v732 = vadd.f32 %v721, 1.0
    %v733 = vadd.f32 %v723, 1.0
    %v734 = vadd.f32 %v725, 1.0
    %v735 = vadd.f32 %v727, 1.0
    %v736 = vrcp.pop %v728
    %v737 = vmul.f32 %v728, %v736
    %v738 = vsub.f32 1.0, %v737
    %v739 = vmul.f32 %v736, %v738
    %v740 = vadd.f32 %v736, %v739
    %vm741 = vweird.f32 %v728
    %vm742 = vweird.f32 %v736
    %vm743 = vmor %vm741, %vm742
    %v744 = vsel %vm743, %v736, %v740
    %v745 = vand.u32 2147483647, %v728
    %vm746 = vcmp.eq.f32.partialorder %v745, 8.507059e+37
    %v747 = vand.u32 %v728, 2147483648
    %v748 = vor.u32 1.1754944e-38, %v747
    %v749 = vsel %vm746, %v748, %v744
    %v750 = vmul.f32 1.0, %v749
    %v751 = vrcp.pop %v729
    %v752 = vmul.f32 %v729, %v751
    %v753 = vsub.f32 1.0, %v752
    %v754 = vmul.f32 %v751, %v753
    %v755 = vadd.f32 %v751, %v754
    %vm756 = vweird.f32 %v729
    %vm757 = vweird.f32 %v751
    %vm758 = vmor %vm756, %vm757
    %v759 = vsel %vm758, %v751, %v755
    %v760 = vand.u32 2147483647, %v729
    %vm761 = vcmp.eq.f32.partialorder %v760, 8.507059e+37
    %v762 = vand.u32 %v729, 2147483648
    %v763 = vor.u32 1.1754944e-38, %v762
    %v764 = vsel %vm761, %v763, %v759
    %v765 = vmul.f32 1.0, %v764
    %v766 = vrcp.pop %v730
    %v767 = vmul.f32 %v730, %v766
    %v768 = vsub.f32 1.0, %v767
    %v769 = vmul.f32 %v766, %v768
    %v770 = vadd.f32 %v766, %v769
    %vm771 = vweird.f32 %v730
    %vm772 = vweird.f32 %v766
    %vm773 = vmor %vm771, %vm772
    %v774 = vsel %vm773, %v766, %v770
    %v775 = vand.u32 2147483647, %v730
    %vm776 = vcmp.eq.f32.partialorder %v775, 8.507059e+37
    %v777 = vand.u32 %v730, 2147483648
    %v778 = vor.u32 1.1754944e-38, %v777
    %v779 = vsel %vm776, %v778, %v774
    %v780 = vmul.f32 1.0, %v779
    %v781 = vrcp.pop %v731
    %v782 = vmul.f32 %v731, %v781
    %v783 = vsub.f32 1.0, %v782
    %v784 = vmul.f32 %v781, %v783
    %v785 = vadd.f32 %v781, %v784
    %vm786 = vweird.f32 %v731
    %vm787 = vweird.f32 %v781
    %vm788 = vmor %vm786, %vm787
    %v789 = vsel %vm788, %v781, %v785
    %v790 = vand.u32 2147483647, %v731
    %vm791 = vcmp.eq.f32.partialorder %v790, 8.507059e+37
    %v792 = vand.u32 %v731, 2147483648
    %v793 = vor.u32 1.1754944e-38, %v792
    %v794 = vsel %vm791, %v793, %v789
    %v795 = vmul.f32 1.0, %v794
    %v796 = vrcp.pop %v732
    %v797 = vmul.f32 %v732, %v796
    %v798 = vsub.f32 1.0, %v797
    %v799 = vmul.f32 %v796, %v798
    %v800 = vadd.f32 %v796, %v799
    %vm801 = vweird.f32 %v732
    %vm802 = vweird.f32 %v796
    %vm803 = vmor %vm801, %vm802
    %v804 = vsel %vm803, %v796, %v800
    %v805 = vand.u32 2147483647, %v732
    %vm806 = vcmp.eq.f32.partialorder %v805, 8.507059e+37
    %v807 = vand.u32 %v732, 2147483648
    %v808 = vor.u32 1.1754944e-38, %v807
    %v809 = vsel %vm806, %v808, %v804
    %v810 = vmul.f32 1.0, %v809
    %v811 = vrcp.pop %v733
    %v812 = vmul.f32 %v733, %v811
    %v813 = vsub.f32 1.0, %v812
    %v814 = vmul.f32 %v811, %v813
    %v815 = vadd.f32 %v811, %v814
    %vm816 = vweird.f32 %v733
    %vm817 = vweird.f32 %v811
    %vm818 = vmor %vm816, %vm817
    %v819 = vsel %vm818, %v811, %v815
    %v820 = vand.u32 2147483647, %v733
    %vm821 = vcmp.eq.f32.partialorder %v820, 8.507059e+37
    %v822 = vand.u32 %v733, 2147483648
    %v823 = vor.u32 1.1754944e-38, %v822
    %v824 = vsel %vm821, %v823, %v819
    %v825 = vmul.f32 1.0, %v824
    %v826 = vrcp.pop %v734
    %v827 = vmul.f32 %v734, %v826
    %v828 = vsub.f32 1.0, %v827
    %v829 = vmul.f32 %v826, %v828
    %v830 = vadd.f32 %v826, %v829
    %vm831 = vweird.f32 %v734
    %vm832 = vweird.f32 %v826
    %vm833 = vmor %vm831, %vm832
    %v834 = vsel %vm833, %v826, %v830
    %v835 = vand.u32 2147483647, %v734
    %vm836 = vcmp.eq.f32.partialorder %v835, 8.507059e+37
    %v837 = vand.u32 %v734, 2147483648
    %v838 = vor.u32 1.1754944e-38, %v837
    %v839 = vsel %vm836, %v838, %v834
    %v840 = vmul.f32 1.0, %v839
    %v841 = vrcp.pop %v735
    %v842 = vmul.f32 %v735, %v841
    %v843 = vsub.f32 1.0, %v842
    %v844 = vmul.f32 %v841, %v843
    %v845 = vadd.f32 %v841, %v844
    %vm846 = vweird.f32 %v735
    %vm847 = vweird.f32 %v841
    %vm848 = vmor %vm846, %vm847
    %v849 = vsel %vm848, %v841, %v845
    %v850 = vand.u32 2147483647, %v735
    %vm851 = vcmp.eq.f32.partialorder %v850, 8.507059e+37
    %v852 = vand.u32 %v735, 2147483648
    %v853 = vor.u32 1.1754944e-38, %v852
    %v854 = vsel %vm851, %v853, %v849
    %v855 = vmul.f32 1.0, %v854
    %s856 = sld [smem:[#allocation2 + $0x1]]
    %s857 = smax.f32 %s856, 0.0
    %v858 = vld [vmem:[%s2] sm:$0x1]
    %v859 = vld [vmem:[%s2 + $0x1] sm:$0x1]
    %v860 = vld [vmem:[%s2 + $0x2] sm:$0x1]
    %v861 = vld [vmem:[%s2 + $0x3] sm:$0x1]
    %v862 = vld [vmem:[%s2 + $0x4] sm:$0x1]
    %v863 = vld [vmem:[%s2 + $0x5] sm:$0x1]
    %v864 = vld [vmem:[%s2 + $0x6] sm:$0x1]
    %v865 = vld [vmem:[%s2 + $0x7] sm:$0x1]
    %vm866 = vcmp.gt.f32.partialorder %v858, 0.0
    %vm867 = vcmp.gt.f32.partialorder %v859, 0.0
    %vm868 = vcmp.gt.f32.partialorder %v860, 0.0
    %vm869 = vcmp.gt.f32.partialorder %v861, 0.0
    %vm870 = vcmp.gt.f32.partialorder %v862, 0.0
    %vm871 = vcmp.gt.f32.partialorder %v863, 0.0
    %vm872 = vcmp.gt.f32.partialorder %v864, 0.0
    %vm873 = vcmp.gt.f32.partialorder %v865, 0.0
    %v874 = vsel %vm866, 1.0, 0.0
    %v875 = vsel %vm867, 1.0, 0.0
    %v876 = vsel %vm868, 1.0, 0.0
    %v877 = vsel %vm869, 1.0, 0.0
    %v878 = vsel %vm870, 1.0, 0.0
    %v879 = vsel %vm871, 1.0, 0.0
    %v880 = vsel %vm872, 1.0, 0.0
    %v881 = vsel %vm873, 1.0, 0.0
    %vm882 = vcmask 57344
    %v883 = vsel %vm882, %v874, 0.0
    %884 = vadd.xlane.f32.xlu0 %v883
    %v885 = vpop.xlane.xlu0 %884
    %v886 = vsel %vm882, %v875, 0.0
    %887 = vadd.xlane.f32.xlu0 %v886
    %v888 = vpop.xlane.xlu0 %887
    %v889 = vsel %vm882, %v876, 0.0
    %890 = vadd.xlane.f32.xlu0 %v889
    %v891 = vpop.xlane.xlu0 %890
    %v892 = vsel %vm882, %v877, 0.0
    %893 = vadd.xlane.f32.xlu0 %v892
    %v894 = vpop.xlane.xlu0 %893
    %v895 = vsel %vm882, %v878, 0.0
    %896 = vadd.xlane.f32.xlu0 %v895
    %v897 = vpop.xlane.xlu0 %896
    %v898 = vsel %vm882, %v879, 0.0
    %899 = vadd.xlane.f32.xlu0 %v898
    %v900 = vpop.xlane.xlu0 %899
    %v901 = vsel %vm882, %v880, 0.0
    %902 = vadd.xlane.f32.xlu0 %v901
    %v903 = vpop.xlane.xlu0 %902
    %v904 = vsel %vm882, %v881, 0.0
    %905 = vadd.xlane.f32.xlu0 %v904
    %v906 = vpop.xlane.xlu0 %905
    %p907 = scmp.ne.f32.partialorder %s857, 0.0
    %v908 = vmax.f32 %v885, 1.0
    %v909 = vmax.f32 %v888, 1.0
    %v910 = vmax.f32 %v891, 1.0
    %v911 = vmax.f32 %v894, 1.0
    %v912 = vmax.f32 %v897, 1.0
    %v913 = vmax.f32 %v900, 1.0
    %v914 = vmax.f32 %v903, 1.0
    %v915 = vmax.f32 %v906, 1.0
    %s916 = scalar_select %p907, 1, 0
    %v917 = vstv %s916
    %vm918 = vcmp.eq.s32.totalorder %v917, 1
    %v919 = vsel %vm918, %v908, 8.0
    %v920 = vsel %vm918, %v909, 8.0
    %v921 = vsel %vm918, %v910, 8.0
    %v922 = vsel %vm918, %v911, 8.0
    %v923 = vsel %vm918, %v912, 8.0
    %v924 = vsel %vm918, %v913, 8.0
    %v925 = vsel %vm918, %v914, 8.0
    %v926 = vsel %vm918, %v915, 8.0
    %v927 = vrcp.pop %v919
    %v928 = vmul.f32 %v919, %v927
    %v929 = vsub.f32 1.0, %v928
    %v930 = vmul.f32 %v927, %v929
    %v931 = vadd.f32 %v927, %v930
    %vm932 = vweird.f32 %v919
    %vm933 = vweird.f32 %v927
    %vm934 = vmor %vm932, %vm933
    %v935 = vsel %vm934, %v927, %v931
    %v936 = vand.u32 2147483647, %v919
    %vm937 = vcmp.eq.f32.partialorder %v936, 8.507059e+37
    %v938 = vand.u32 %v919, 2147483648
    %v939 = vor.u32 1.1754944e-38, %v938
    %v940 = vsel %vm937, %v939, %v935
    %v941 = vmul.f32 1.0, %v940
    %v942 = vrcp.pop %v920
    %v943 = vmul.f32 %v920, %v942
    %v944 = vsub.f32 1.0, %v943
    %v945 = vmul.f32 %v942, %v944
    %v946 = vadd.f32 %v942, %v945
    %vm947 = vweird.f32 %v920
    %vm948 = vweird.f32 %v942
    %vm949 = vmor %vm947, %vm948
    %v950 = vsel %vm949, %v942, %v946
    %v951 = vand.u32 2147483647, %v920
    %vm952 = vcmp.eq.f32.partialorder %v951, 8.507059e+37
    %v953 = vand.u32 %v920, 2147483648
    %v954 = vor.u32 1.1754944e-38, %v953
    %v955 = vsel %vm952, %v954, %v950
    %v956 = vmul.f32 1.0, %v955
    %v957 = vrcp.pop %v921
    %v958 = vmul.f32 %v921, %v957
    %v959 = vsub.f32 1.0, %v958
    %v960 = vmul.f32 %v957, %v959
    %v961 = vadd.f32 %v957, %v960
    %vm962 = vweird.f32 %v921
    %vm963 = vweird.f32 %v957
    %vm964 = vmor %vm962, %vm963
    %v965 = vsel %vm964, %v957, %v961
    %v966 = vand.u32 2147483647, %v921
    %vm967 = vcmp.eq.f32.partialorder %v966, 8.507059e+37
    %v968 = vand.u32 %v921, 2147483648
    %v969 = vor.u32 1.1754944e-38, %v968
    %v970 = vsel %vm967, %v969, %v965
    %v971 = vmul.f32 1.0, %v970
    %v972 = vrcp.pop %v922
    %v973 = vmul.f32 %v922, %v972
    %v974 = vsub.f32 1.0, %v973
    %v975 = vmul.f32 %v972, %v974
    %v976 = vadd.f32 %v972, %v975
    %vm977 = vweird.f32 %v922
    %vm978 = vweird.f32 %v972
    %vm979 = vmor %vm977, %vm978
    %v980 = vsel %vm979, %v972, %v976
    %v981 = vand.u32 2147483647, %v922
    %vm982 = vcmp.eq.f32.partialorder %v981, 8.507059e+37
    %v983 = vand.u32 %v922, 2147483648
    %v984 = vor.u32 1.1754944e-38, %v983
    %v985 = vsel %vm982, %v984, %v980
    %v986 = vmul.f32 1.0, %v985
    %v987 = vrcp.pop %v923
    %v988 = vmul.f32 %v923, %v987
    %v989 = vsub.f32 1.0, %v988
    %v990 = vmul.f32 %v987, %v989
    %v991 = vadd.f32 %v987, %v990
    %vm992 = vweird.f32 %v923
    %vm993 = vweird.f32 %v987
    %vm994 = vmor %vm992, %vm993
    %v995 = vsel %vm994, %v987, %v991
    %v996 = vand.u32 2147483647, %v923
    %vm997 = vcmp.eq.f32.partialorder %v996, 8.507059e+37
    %v998 = vand.u32 %v923, 2147483648
    %v999 = vor.u32 1.1754944e-38, %v998
    %v1000 = vsel %vm997, %v999, %v995
    %v1001 = vmul.f32 1.0, %v1000
    %v1002 = vrcp.pop %v924
    %v1003 = vmul.f32 %v924, %v1002
    %v1004 = vsub.f32 1.0, %v1003
    %v1005 = vmul.f32 %v1002, %v1004
    %v1006 = vadd.f32 %v1002, %v1005
    %vm1007 = vweird.f32 %v924
    %vm1008 = vweird.f32 %v1002
    %vm1009 = vmor %vm1007, %vm1008
    %v1010 = vsel %vm1009, %v1002, %v1006
    %v1011 = vand.u32 2147483647, %v924
    %vm1012 = vcmp.eq.f32.partialorder %v1011, 8.507059e+37
    %v1013 = vand.u32 %v924, 2147483648
    %v1014 = vor.u32 1.1754944e-38, %v1013
    %v1015 = vsel %vm1012, %v1014, %v1010
    %v1016 = vmul.f32 1.0, %v1015
    %v1017 = vrcp.pop %v925
    %v1018 = vmul.f32 %v925, %v1017
    %v1019 = vsub.f32 1.0, %v1018
    %v1020 = vmul.f32 %v1017, %v1019
    %v1021 = vadd.f32 %v1017, %v1020
    %vm1022 = vweird.f32 %v925
    %vm1023 = vweird.f32 %v1017
    %vm1024 = vmor %vm1022, %vm1023
    %v1025 = vsel %vm1024, %v1017, %v1021
    %v1026 = vand.u32 2147483647, %v925
    %vm1027 = vcmp.eq.f32.partialorder %v1026, 8.507059e+37
    %v1028 = vand.u32 %v925, 2147483648
    %v1029 = vor.u32 1.1754944e-38, %v1028
    %v1030 = vsel %vm1027, %v1029, %v1025
    %v1031 = vmul.f32 1.0, %v1030
    %v1032 = vrcp.pop %v926
    %v1033 = vmul.f32 %v926, %v1032
    %v1034 = vsub.f32 1.0, %v1033
    %v1035 = vmul.f32 %v1032, %v1034
    %v1036 = vadd.f32 %v1032, %v1035
    %vm1037 = vweird.f32 %v926
    %vm1038 = vweird.f32 %v1032
    %vm1039 = vmor %vm1037, %vm1038
    %v1040 = vsel %vm1039, %v1032, %v1036
    %v1041 = vand.u32 2147483647, %v926
    %vm1042 = vcmp.eq.f32.partialorder %v1041, 8.507059e+37
    %v1043 = vand.u32 %v926, 2147483648
    %v1044 = vor.u32 1.1754944e-38, %v1043
    %v1045 = vsel %vm1042, %v1044, %v1040
    %v1046 = vmul.f32 1.0, %v1045
    %v1047 = vmul.f32 %v750, %v45
    %v1048 = vmul.f32 %v765, %v45
    %v1049 = vmul.f32 %v780, %v45
    %v1050 = vmul.f32 %v795, %v45
    %v1051 = vmul.f32 %v810, %v45
    %v1052 = vmul.f32 %v825, %v45
    %v1053 = vmul.f32 %v840, %v45
    %v1054 = vmul.f32 %v855, %v45
    %v1055 = vpack.c.bf16 %v1047, %v1047
    %v1056 = vpack.c.bf16 %v1048, %v1048
    %v1057 = vpack.c.bf16 %v1049, %v1049
    %v1058 = vpack.c.bf16 %v1050, %v1050
    %v1059 = vpack.c.bf16 %v1051, %v1051
    %v1060 = vpack.c.bf16 %v1052, %v1052
    %v1061 = vpack.c.bf16 %v1053, %v1053
    %v1062 = vpack.c.bf16 %v1054, %v1054
    %v1063 = vpack.c.bf16 %v874, %v874
    %v1064 = vpack.c.bf16 %v875, %v875
    %v1065 = vpack.c.bf16 %v876, %v876
    %v1066 = vpack.c.bf16 %v877, %v877
    %v1067 = vpack.c.bf16 %v878, %v878
    %v1068 = vpack.c.bf16 %v879, %v879
    %v1069 = vpack.c.bf16 %v880, %v880
    %v1070 = vpack.c.bf16 %v881, %v881
    %vm1071 = vcmask 64512
    %v1073 = vsel %vm1071, %v1063, 0
    %vm1075 = vcmask 1043456
    %v1077 = vsel %vm1075, %v1055, 0
    %1079 = vmatpush.bf16.msra.mxu0 0
    %1080 = vmatpush.bf16.msra.mxu0 0
    %1081 = vmatpush.bf16.msra.mxu0 0
    %1082 = vmatpush.bf16.msra.mxu0 0
    %1083 = vmatpush.bf16.msra.mxu0 0
    %1084 = vmatpush.bf16.msra.mxu0 0
    %1085 = vmatpush.bf16.msra.mxu0 0
    %1086 = vmatpush.bf16.msra.mxu0 %v1077
    %1087 = vmatmul.bf16.gmra.mxu0 %v1073
    %v1088 = vpop.f32.mrf.mxu0
    %v1089 = vadd.f32 0.0, %v1088
    %v1090 = vpop.f32.mrf.mxu0
    %1091 = vdwg.mxu0
    %v1093 = vsel %vm1071, %v1064, 0
    %v1096 = vsel %vm1075, %v1056, 0
    %1098 = vmatpush.bf16.msra.mxu0 0
    %1099 = vmatpush.bf16.msra.mxu0 0
    %1100 = vmatpush.bf16.msra.mxu0 0
    %1101 = vmatpush.bf16.msra.mxu0 0
    %1102 = vmatpush.bf16.msra.mxu0 0
    %1103 = vmatpush.bf16.msra.mxu0 0
    %1104 = vmatpush.bf16.msra.mxu0 0
    %1105 = vmatpush.bf16.msra.mxu0 %v1096
    %1106 = vmatmul.bf16.gmra.mxu0 %v1093
    %v1107 = vpop.f32.mrf.mxu0
    %v1108 = vadd.f32 0.0, %v1107
    %v1109 = vpop.f32.mrf.mxu0
    %1110 = vdwg.mxu0
    %v1112 = vsel %vm1071, %v1065, 0
    %v1115 = vsel %vm1075, %v1057, 0
    %1117 = vmatpush.bf16.msra.mxu0 0
    %1118 = vmatpush.bf16.msra.mxu0 0
    %1119 = vmatpush.bf16.msra.mxu0 0
    %1120 = vmatpush.bf16.msra.mxu0 0
    %1121 = vmatpush.bf16.msra.mxu0 0
    %1122 = vmatpush.bf16.msra.mxu0 0
    %1123 = vmatpush.bf16.msra.mxu0 0
    %1124 = vmatpush.bf16.msra.mxu0 %v1115
    %1125 = vmatmul.bf16.gmra.mxu0 %v1112
    %v1126 = vpop.f32.mrf.mxu0
    %v1127 = vadd.f32 0.0, %v1126
    %v1128 = vpop.f32.mrf.mxu0
    %1129 = vdwg.mxu0
    %v1131 = vsel %vm1071, %v1066, 0
    %v1134 = vsel %vm1075, %v1058, 0
    %1136 = vmatpush.bf16.msra.mxu0 0
    %1137 = vmatpush.bf16.msra.mxu0 0
    %1138 = vmatpush.bf16.msra.mxu0 0
    %1139 = vmatpush.bf16.msra.mxu0 0
    %1140 = vmatpush.bf16.msra.mxu0 0
    %1141 = vmatpush.bf16.msra.mxu0 0
    %1142 = vmatpush.bf16.msra.mxu0 0
    %1143 = vmatpush.bf16.msra.mxu0 %v1134
    %1144 = vmatmul.bf16.gmra.mxu0 %v1131
    %v1145 = vpop.f32.mrf.mxu0
    %v1146 = vadd.f32 0.0, %v1145
    %v1147 = vpop.f32.mrf.mxu0
    %1148 = vdwg.mxu0
    %v1150 = vsel %vm1071, %v1067, 0
    %v1153 = vsel %vm1075, %v1059, 0
    %1155 = vmatpush.bf16.msra.mxu0 0
    %1156 = vmatpush.bf16.msra.mxu0 0
    %1157 = vmatpush.bf16.msra.mxu0 0
    %1158 = vmatpush.bf16.msra.mxu0 0
    %1159 = vmatpush.bf16.msra.mxu0 0
    %1160 = vmatpush.bf16.msra.mxu0 0
    %1161 = vmatpush.bf16.msra.mxu0 0
    %1162 = vmatpush.bf16.msra.mxu0 %v1153
    %1163 = vmatmul.bf16.gmra.mxu0 %v1150
    %v1164 = vpop.f32.mrf.mxu0
    %v1165 = vadd.f32 0.0, %v1164
    %v1166 = vpop.f32.mrf.mxu0
    %1167 = vdwg.mxu0
    %v1169 = vsel %vm1071, %v1068, 0
    %v1172 = vsel %vm1075, %v1060, 0
    %1174 = vmatpush.bf16.msra.mxu0 0
    %1175 = vmatpush.bf16.msra.mxu0 0
    %1176 = vmatpush.bf16.msra.mxu0 0
    %1177 = vmatpush.bf16.msra.mxu0 0
    %1178 = vmatpush.bf16.msra.mxu0 0
    %1179 = vmatpush.bf16.msra.mxu0 0
    %1180 = vmatpush.bf16.msra.mxu0 0
    %1181 = vmatpush.bf16.msra.mxu0 %v1172
    %1182 = vmatmul.bf16.gmra.mxu0 %v1169
    %v1183 = vpop.f32.mrf.mxu0
    %v1184 = vadd.f32 0.0, %v1183
    %v1185 = vpop.f32.mrf.mxu0
    %1186 = vdwg.mxu0
    %v1188 = vsel %vm1071, %v1069, 0
    %v1191 = vsel %vm1075, %v1061, 0
    %1193 = vmatpush.bf16.msra.mxu0 0
    %1194 = vmatpush.bf16.msra.mxu0 0
    %1195 = vmatpush.bf16.msra.mxu0 0
    %1196 = vmatpush.bf16.msra.mxu0 0
    %1197 = vmatpush.bf16.msra.mxu0 0
    %1198 = vmatpush.bf16.msra.mxu0 0
    %1199 = vmatpush.bf16.msra.mxu0 0
    %1200 = vmatpush.bf16.msra.mxu0 %v1191
    %1201 = vmatmul.bf16.gmra.mxu0 %v1188
    %v1202 = vpop.f32.mrf.mxu0
    %v1203 = vadd.f32 0.0, %v1202
    %v1204 = vpop.f32.mrf.mxu0
    %1205 = vdwg.mxu0
    %v1207 = vsel %vm1071, %v1070, 0
    %v1210 = vsel %vm1075, %v1062, 0
    %1212 = vmatpush.bf16.msra.mxu0 0
    %1213 = vmatpush.bf16.msra.mxu0 0
    %1214 = vmatpush.bf16.msra.mxu0 0
    %1215 = vmatpush.bf16.msra.mxu0 0
    %1216 = vmatpush.bf16.msra.mxu0 0
    %1217 = vmatpush.bf16.msra.mxu0 0
    %1218 = vmatpush.bf16.msra.mxu0 0
    %1219 = vmatpush.bf16.msra.mxu0 %v1210
    %1220 = vmatmul.bf16.gmra.mxu0 %v1207
    %v1221 = vpop.f32.mrf.mxu0
    %v1222 = vadd.f32 0.0, %v1221
    %v1223 = vpop.f32.mrf.mxu0
    %1224 = vdwg.mxu0
    %v1225 = vmul.f32 %v1089, %v941
    %v1226 = vmul.f32 %v1108, %v956
    %v1227 = vmul.f32 %v1127, %v971
    %v1228 = vmul.f32 %v1146, %v986
    %v1229 = vmul.f32 %v1165, %v1001
    %v1230 = vmul.f32 %v1184, %v1016
    %v1231 = vmul.f32 %v1203, %v1031
    %v1232 = vmul.f32 %v1222, %v1046
    %v1233 = vpack.c.bf16 %v1225, %v1225
    %v1234 = vpack.c.bf16 %v1226, %v1226
    %v1235 = vpack.c.bf16 %v1227, %v1227
    %v1236 = vpack.c.bf16 %v1228, %v1228
    %v1237 = vpack.c.bf16 %v1229, %v1229
    %v1238 = vpack.c.bf16 %v1230, %v1230
    %v1239 = vpack.c.bf16 %v1231, %v1231
    %v1240 = vpack.c.bf16 %v1232, %v1232
    %s1241 = scalar_lea.vmem %s6, 32
    %v1242 = vld [vmem:[%s1241] sm:$0xf]
    %v1243 = vld [vmem:[%s1241 + $0x4] sm:$0xf]
    %v1244 = vld [vmem:[%s1241 + $0x8] sm:$0xf]
    %v1245 = vld [vmem:[%s1241 + $0xc] sm:$0xf]
    %v1246 = vperm.slane %v43, 7
    %v1255 = vunpack.c.l.b16 %v1233
    %v1256 = vunpack.c.l.b16 %v1234
    %v1257 = vunpack.c.l.b16 %v1235
    %v1258 = vunpack.c.l.b16 %v1236
    %v1259 = vunpack.c.l.b16 %v1237
    %v1260 = vunpack.c.l.b16 %v1238
    %v1261 = vunpack.c.l.b16 %v1239
    %v1262 = vunpack.c.l.b16 %v1240
    %v1263 = vrot.slane %v1256, 7
    %vm1264 = vcmask 1041409
    %v1265 = vsel %vm1264, %v1263, %v1255
    %v1266 = vrot.slane %v1257, 6
    %vm1267 = vcmask 1042434
    %v1268 = vsel %vm1267, %v1266, %v1265
    %v1269 = vrot.slane %v1258, 5
    %vm1270 = vcmask 1043459
    %v1271 = vsel %vm1270, %v1269, %v1268
    %v1272 = vrot.slane %v1259, 4
    %vm1273 = vcmask 1044484
    %v1274 = vsel %vm1273, %v1272, %v1271
    %v1275 = vrot.slane %v1260, 3
    %vm1276 = vcmask 1045509
    %v1277 = vsel %vm1276, %v1275, %v1274
    %v1278 = vrot.slane %v1261, 2
    %vm1279 = vcmask 1046534
    %v1280 = vsel %vm1279, %v1278, %v1277
    %v1281 = vrot.slane %v1262, 1
    %vm1282 = vcmask 1047559
    %v1283 = vsel %vm1282, %v1281, %v1280
    %v1284 = vpack.c.b16 %v1283, %v1283
    %v1289 = vunpack.c.l.b16 %v1242
    %v1290 = vunpack.c.l.b16 %v1243
    %v1291 = vunpack.c.l.b16 %v1244
    %v1292 = vunpack.c.l.b16 %v1245
    %v1293 = vpack.c.b16 %v1290, %v1289
    %v1294 = vpack.c.b16 %v1292, %v1291
    %v1298 = vsel %vm164, %v1284, 0
    %1300 = vmatpush.bf16.msra.mxu0 0
    %1301 = vmatpush.bf16.msra.mxu0 0
    %1302 = vmatpush.bf16.msra.mxu0 0
    %1303 = vmatpush.bf16.msra.mxu0 0
    %1304 = vmatpush.bf16.msra.mxu0 0
    %1305 = vmatpush.bf16.msra.mxu0 0
    %1306 = vmatpush.bf16.msra.mxu0 %v1294
    %1307 = vmatpush.bf16.msra.mxu0 %v1293
    %1308 = vmatmul.bf16.gmra.mxu0 %v1298
    %v1309 = vpop.f32.mrf.mxu0
    %v1310 = vadd.f32 %v1246, %v1309
    %v1311 = vpop.f32.mrf.mxu0
    %1312 = vdwg.mxu0
    %v1313 = vsel %vm164, %v1310, 0.0
    %1314 = vadd.xlane.f32.xlu0 %v1313
    %v1315 = vpop.xlane.xlu0 %1314
    %v1316 = vmul.f32 %v1315, %v195
    %v1317 = vsub.f32 %v1310, %v1316
    %v1318 = vmul.f32 %v1317, %v1317
    %v1319 = vsel %vm164, %v1318, 0.0
    %1320 = vadd.xlane.f32.xlu0 %v1319
    %v1321 = vpop.xlane.xlu0 %1320
    %v1322 = vmul.f32 %v1321, %v195
    %v1323 = vadd.f32 %v1322, 1e-05
    %v1324 = vrsqrt.pop %v1323
    %v1325 = vmul.f32 %v1324, %v1323
    %v1326 = vmul.f32 %v1325, %v1324
    %v1327 = vmul.f32 0.5, %v1326
    %v1328 = vsub.f32 1.5, %v1327
    %v1329 = vmul.f32 %v1324, %v1328
    %vm1330 = vweird.f32 %v1323
    %vm1331 = vweird.f32 %v1324
    %vm1332 = vmor %vm1330, %vm1331
    %v1333 = vsel %vm1332, %v1324, %v1329
    %v1334 = vmul.f32 %v1317, %v1333
    %v1335 = vperm.slane %v44, 0
    %v1336 = vmul.f32 %v1335, %v1334
    %v1337 = vperm.slane %v44, 1
    %v1338 = vadd.f32 %v1336, %v1337
    %v1339 = vmax.f32 %v1338, 0.0
    %v1340 = vld [vmem:[%s5] sm:$0xff]
    %v1341 = vadd.f32 %v1339, %v1340
    %v1342 = vtanh.pop %v1341
    %v1343 = vadd.f32 %v48, %v1342
    %1344 = vst.msk [vmem:[%s8] sm:$0xff] %vm164, %v1343
    %1346 = vrot.lane.b32.xlu0 %v1341, 32
    %v1347 = vpop.permute.xlu0 %1346
    %vm1349 = vcmask 523520
    %1350 = vst.msk [vmem:[%s8] sm:$0xff] %vm1349, %v1347
    // Predicated region
    $region38: #{branch_1_fun.1} parent=1 // pred_check
      _
    $region39: #{branch_1_fun.1} parent=1 // pred_check_branch
      %1352 = sbr.rel (0) target = $region41
    $region40: #{branch_1_fun.1} parent=1 // pred_region
      _
    $region41: #{branch_1_fun.1} parent=1 // pred_fallthru
      _
    // Predicated region
    $region42: #{branch_1_fun.1} parent=1 // pred_check
      _
    $region43: #{branch_1_fun.1} parent=1 // pred_check_branch
      %1354 = sbr.rel (0) target = $region45
    $region44: #{branch_1_fun.1} parent=1 // pred_region
      _
    $region45: #{branch_1_fun.1} parent=1 // pred_fallthru
      _
    %1355 = vsyncpa [#allocation3], 1

</llo_original>
